<compile_context>
chip_gen: v6e
topology: v6e:2x2x1
jax: 0.10.0
libtpu: 0.0.40
codegen_flags: <defaults>
</compile_context>

<pallas_src>
import math
from functools import partial

import jax
import jax.numpy as jnp
from jax.experimental import pallas as pl
from jax.experimental.pallas import tpu as pltpu


def get_kernel_size(channel):
    k = int(abs((math.log2(channel) + 1) / 2))
    return k if k % 2 else k + 1


# ---------------------------------------------------------------------------
# Fused kernel: depthwise dilated conv -> fused block-diagonal 1x1 conv (MXU)
#               -> BatchNorm (batch stats) -> ReLU -> ECA gate.
# ---------------------------------------------------------------------------
def _mstc_kernel(x_ref, wdw_ref, wbd_ref, bpw_ref, gamma_ref, beta_ref, weca_ref,
                 out_ref, xpad_ref, ydw_ref,
                 *, dilations, ksize, max_pad, eps, k_eca):
    B, C_in, T = x_ref.shape
    C_out = out_ref.shape[1]
    inv_n = 1.0 / float(B * T)
    inv_t = 1.0 / float(T)

    # Pre-zero the padded-x scratch once; the middle is overwritten per batch element,
    # the pad stripes stay zero.  Dilated taps are then static lane-offset slices.
    xpad_ref[...] = jnp.zeros_like(xpad_ref)

    # --- depthwise dilated conv; branches stacked on sublanes, batches folded on lanes ---
    for b in range(B):                                      # B is small & static
        xpad_ref[:, max_pad:max_pad + T] = x_ref[b]         # (C_in, T) into the middle
        xp = xpad_ref[...]                                  # (C_in, T + 2*max_pad)
        ys = []
        for br, d in enumerate(dilations):
            off = max_pad - (ksize - 1) * d // 2
            w = wdw_ref[br]                                 # (C_in, K)
            y = w[:, 0:1] * xp[:, off:off + T]
            for j in range(1, ksize):
                s = off + j * d
                y = y + w[:, j:j + 1] * xp[:, s:s + T]
            ys.append(y)                                    # (C_in, T), bias folded away
        ydw_ref[:, b * T:(b + 1) * T] = jnp.concatenate(ys, axis=0)   # (n_br*C_in, T)

    # --- fused pointwise 1x1 conv for all branches & batches: ONE MXU matmul ---
    z = jnp.dot(wbd_ref[...], ydw_ref[...],
                preferred_element_type=jnp.float32,
                precision=jax.lax.Precision.HIGHEST) + bpw_ref[...]   # (C_out, B*T)

    # --- BatchNorm (training-mode batch statistics, biased variance) + ReLU ---
    mean = jnp.sum(z, axis=1, keepdims=True) * inv_n
    zc = z - mean
    var = jnp.sum(zc * zc, axis=1, keepdims=True) * inv_n
    scale = gamma_ref[...] * jax.lax.rsqrt(var + eps)
    a = jnp.maximum(zc * scale + beta_ref[...], 0.0)                  # (C_out, B*T)

    # --- ECA: per-batch time mean, k-tap conv across channels, sigmoid gate ---
    pad_e = (k_eca - 1) // 2
    for b in range(B):
        ab = a[:, b * T:(b + 1) * T]                                  # (C_out, T)
        ymean = jnp.sum(ab, axis=1, keepdims=True) * inv_t            # (C_out, 1)
        if pad_e > 0:
            zp = jnp.zeros((pad_e, 1), jnp.float32)
            yp = jnp.concatenate([zp, ymean, zp], axis=0)             # (C_out + 2*pad_e, 1)
        else:
            yp = ymean
        att = weca_ref[0] * yp[0:C_out, :]
        for j in range(1, k_eca):
            att = att + weca_ref[j] * yp[j:j + C_out, :]
        att = jax.nn.sigmoid(att)                                     # (C_out, 1)
        out_ref[b] = ab * att                                         # (C_out, T), NCW


@partial(jax.jit, static_argnames=("dilations", "kernel_size"))
def multi_scale_temporal_conv(x, params, dilations=(1, 2, 4, 8), kernel_size=3):
    """x: (B, C_in, T) float32 (PyTorch NCW). Returns (B, C_out, T)."""
    wdw, bdw, wpw, bpw, gamma, beta, weca = params
    B, C_in, T = x.shape
    n_br = len(dilations)
    C_pb = wpw.shape[-1]
    C_out = C_pb * n_br
    k_eca = int(weca.shape[0])
    K = kernel_size
    max_pad = (K - 1) * max(dilations) // 2
    eps = 1e-5
    f32 = jnp.float32

    # --- tiny parameter repack (channels-on-sublanes layouts; done under jit) ---
    wdw_s = jnp.transpose(wdw.astype(f32), (0, 2, 1))          # (n_br, C_in, K)
    # block-diagonal fused 1x1 weight (C_out, n_br*C_in)
    wbd = jnp.zeros((C_out, n_br * C_in), f32)
    for br in range(n_br):
        wbd = wbd.at[br * C_pb:(br + 1) * C_pb, br * C_in:(br + 1) * C_in].set(
            wpw[br].astype(f32).T)
    # fold the depthwise bias into the pointwise bias:  b_eff = b_pw + W_pw^T b_dw (exact)
    bdw_f = bdw.astype(f32).reshape(n_br, C_in)
    bpw_eff = bpw.astype(f32).reshape(n_br, C_pb) + jnp.einsum(
        'bic,bi->bc', wpw.astype(f32), bdw_f)
    bpw_s = bpw_eff.reshape(C_out, 1)
    gamma_s = gamma.astype(f32).reshape(C_out, 1)
    beta_s = beta.astype(f32).reshape(C_out, 1)

    out = pl.pallas_call(
        partial(_mstc_kernel, dilations=tuple(dilations), ksize=K,
                max_pad=max_pad, eps=eps, k_eca=k_eca),
        grid=(1,),
        in_specs=[
            pl.BlockSpec((B, C_in, T), lambda i: (0, 0, 0)),           # x (full, NCW)
            pl.BlockSpec((n_br, C_in, K), lambda i: (0, 0, 0)),        # depthwise w
            pl.BlockSpec((C_out, n_br * C_in), lambda i: (0, 0)),      # fused pointwise w
            pl.BlockSpec((C_out, 1), lambda i: (0, 0)),                # fused bias
            pl.BlockSpec((C_out, 1), lambda i: (0, 0)),                # BN gamma
            pl.BlockSpec((C_out, 1), lambda i: (0, 0)),                # BN beta
            pl.BlockSpec(memory_space=pltpu.MemorySpace.SMEM),         # ECA conv weights
        ],
        out_specs=pl.BlockSpec((B, C_out, T), lambda i: (0, 0, 0)),
        out_shape=jax.ShapeDtypeStruct((B, C_out, T), f32),
        scratch_shapes=[
            pltpu.VMEM((C_in, T + 2 * max_pad), f32),                  # padded x (per batch)
            pltpu.VMEM((n_br * C_in, B * T), f32),                     # depthwise outputs
        ],
        compiler_params=pltpu.CompilerParams(
            dimension_semantics=("arbitrary",)),
    )(x.astype(f32), wdw_s, wbd, bpw_s, gamma_s, beta_s, weca.astype(f32))

    return out


def ref_forward(x, params, dilations=(1, 2, 4, 8), kernel_size=3):
    """Pure-JAX reference mirroring the PyTorch forward (NCW layout)."""
    wdw, bdw, wpw, bpw, gamma, beta, weca = params
    B, C_in, T = x.shape
    eps = 1e-5
    outs = []
    for br, d in enumerate(dilations):
        p = (kernel_size - 1) * d // 2
        xp = jnp.pad(x, ((0, 0), (0, 0), (p, p)))
        y = jnp.zeros((B, C_in, T)) + bdw[br].reshape(1, C_in, 1)
        for j in range(kernel_size):
            y = y + wdw[br, j].reshape(1, C_in, 1) * xp[:, :, j * d: j * d + T]
        z = jnp.einsum('io,bit->bot', wpw[br], y,
                       precision=jax.lax.Precision.HIGHEST) + bpw[br].reshape(1, -1, 1)
        mu = jnp.mean(z, axis=(0, 2), keepdims=True)
        var = jnp.mean((z - mu) ** 2, axis=(0, 2), keepdims=True)
        zn = (z - mu) / jnp.sqrt(var + eps)
        zn = zn * gamma[br].reshape(1, -1, 1) + beta[br].reshape(1, -1, 1)
        outs.append(jnp.maximum(zn, 0.0))
    cat = jnp.concatenate(outs, axis=1)              # (B, C_out, T)
    C_out = cat.shape[1]
    ymean = jnp.mean(cat, axis=2)                    # (B, C_out)
    pad_e = (weca.shape[0] - 1) // 2
    yp = jnp.pad(ymean, ((0, 0), (pad_e, pad_e)))
    att = jnp.zeros((B, C_out))
    for j in range(weca.shape[0]):
        att = att + weca[j] * yp[:, j:j + C_out]
    att = jax.nn.sigmoid(att)
    return cat * att[:, :, None]


if __name__ == "__main__":
    # Small shapes consistent with the module: in_channels=8, out_channels=16, T=16, B=2.
    B, C_in, T = 2, 8, 16
    out_channels = 16
    dilations = (1, 2, 4, 8)
    K = 3
    n_br = len(dilations)
    C_pb = out_channels // n_br
    k_eca = get_kernel_size(out_channels)   # = 3 for 16 channels

    key = jax.random.PRNGKey(0)
    kx, k1, k2, k3, k4, k5, k6, k7 = jax.random.split(key, 8)

    x = jax.random.normal(kx, (B, C_in, T), dtype=jnp.float32)

    # Deterministic synthetic parameters (stacked per branch).
    wdw = 0.3 * jax.random.normal(k1, (n_br, K, C_in), dtype=jnp.float32)     # depthwise w
    bdw = 0.1 * jax.random.normal(k2, (n_br, 1, C_in), dtype=jnp.float32)     # depthwise b
    wpw = 0.3 * jax.random.normal(k3, (n_br, C_in, C_pb), dtype=jnp.float32)  # pointwise w
    bpw = 0.1 * jax.random.normal(k4, (n_br, 1, C_pb), dtype=jnp.float32)     # pointwise b
    gamma = 1.0 + 0.1 * jax.random.normal(k5, (n_br, 1, C_pb), dtype=jnp.float32)
    beta = 0.1 * jax.random.normal(k6, (n_br, 1, C_pb), dtype=jnp.float32)
    weca = 0.5 * jax.random.normal(k7, (k_eca,), dtype=jnp.float32)           # ECA conv w

    params = (wdw, bdw, wpw, bpw, gamma, beta, weca)

    out = multi_scale_temporal_conv(x, params, dilations=dilations, kernel_size=K)
    out = jax.block_until_ready(out)

    ref = ref_forward(x, params, dilations=dilations, kernel_size=K)
    assert out.shape == (B, out_channels, T), out.shape
    assert jnp.allclose(out, ref, atol=2e-3, rtol=2e-3), (
        float(jnp.max(jnp.abs(out - ref))))

    print("KERNEL_OK")
</pallas_src>

<mosaic_0001>
module attributes {stable_mosaic.version = 11 : i64} {
  func.func @_mstc_kernel(%arg0: i32, %arg1: memref<2x8x16xf32, #tpu.memory_space<vmem>>, %arg2: memref<4x8x3xf32, #tpu.memory_space<vmem>>, %arg3: memref<16x32xf32, #tpu.memory_space<vmem>>, %arg4: memref<16x1xf32, #tpu.memory_space<vmem>>, %arg5: memref<16x1xf32, #tpu.memory_space<vmem>>, %arg6: memref<16x1xf32, #tpu.memory_space<vmem>>, %arg7: memref<3xf32, #tpu.memory_space<smem>>, %arg8: memref<2x16x16xf32, #tpu.memory_space<vmem>>, %arg9: memref<8x32xf32, #tpu.memory_space<vmem>>, %arg10: memref<32x32xf32, #tpu.memory_space<vmem>>) attributes {dimension_semantics = [#tpu.dimension_semantics<arbitrary>], iteration_bounds = array<i64: 1>, scalar_prefetch = 0 : i64, scratch_operands = 2 : i64, tpu.core_type = #tpu.core_type<tc>, window_params = [{pipeline_mode = #tpu.pipeline_mode<synchronous>, transform_indices = @transform_0, window_bounds = array<i64: 2, 8, 16>}, {pipeline_mode = #tpu.pipeline_mode<synchronous>, transform_indices = @transform_1, window_bounds = array<i64: 4, 8, 3>}, {pipeline_mode = #tpu.pipeline_mode<synchronous>, transform_indices = @transform_2, window_bounds = array<i64: 16, 32>}, {pipeline_mode = #tpu.pipeline_mode<synchronous>, transform_indices = @transform_3, window_bounds = array<i64: 16, 1>}, {pipeline_mode = #tpu.pipeline_mode<synchronous>, transform_indices = @transform_4, window_bounds = array<i64: 16, 1>}, {pipeline_mode = #tpu.pipeline_mode<synchronous>, transform_indices = @transform_5, window_bounds = array<i64: 16, 1>}, {transform_indices = @transform_6, window_bounds = array<i64: 3>}, {pipeline_mode = #tpu.pipeline_mode<synchronous>, transform_indices = @transform_7, window_bounds = array<i64: 2, 16, 16>}]} {
    %cst = arith.constant 0.000000e+00 : f32
    %0 = vector.broadcast %cst : f32 to vector<8x32xf32>
    %c0 = arith.constant 0 : index
    %c0_0 = arith.constant 0 : index
    %1 = vector.load %arg9[%c0, %c0_0] : memref<8x32xf32, #tpu.memory_space<vmem>>, vector<8x32xf32>
    tpu.vector_store %arg9[%c0, %c0_0], %0 {strides = array<i32>} : memref<8x32xf32, #tpu.memory_space<vmem>>, vector<8x32xf32>,
    %c0_1 = arith.constant 0 : index
    %c0_2 = arith.constant 0 : index
    %c0_3 = arith.constant 0 : index
    %2 = vector.load %arg1[%c0_1, %c0_2, %c0_3] : memref<2x8x16xf32, #tpu.memory_space<vmem>>, vector<1x8x16xf32>
    %3 = vector.shape_cast %2 : vector<1x8x16xf32> to vector<8x16xf32>
    %c0_4 = arith.constant 0 : index
    %c8 = arith.constant 8 : index
    %4 = vector.load %arg9[%c0_4, %c8] : memref<8x32xf32, #tpu.memory_space<vmem>>, vector<8x16xf32>
    tpu.vector_store %arg9[%c0_4, %c8], %3 {strides = array<i32>} : memref<8x32xf32, #tpu.memory_space<vmem>>, vector<8x16xf32>,
    %c0_5 = arith.constant 0 : index
    %c0_6 = arith.constant 0 : index
    %5 = vector.load %arg9[%c0_5, %c0_6] : memref<8x32xf32, #tpu.memory_space<vmem>>, vector<8x32xf32>
    %c0_7 = arith.constant 0 : index
    %c0_8 = arith.constant 0 : index
    %c0_9 = arith.constant 0 : index
    %6 = vector.load %arg2[%c0_7, %c0_8, %c0_9] : memref<4x8x3xf32, #tpu.memory_space<vmem>>, vector<1x8x3xf32>
    %7 = vector.shape_cast %6 : vector<1x8x3xf32> to vector<8x3xf32>
    %8 = vector.extract_strided_slice %7 {offsets = [0, 0], sizes = [8, 1], strides = [1, 1]} : vector<8x3xf32> to vector<8x1xf32>
    %9 = vector.extract_strided_slice %5 {offsets = [0, 7], sizes = [8, 16], strides = [1, 1]} : vector<8x32xf32> to vector<8x16xf32>
    %10 = vector.broadcast %8 : vector<8x1xf32> to vector<8x16xf32>
    %11 = arith.mulf %10, %9 : vector<8x16xf32>
    %12 = vector.extract_strided_slice %7 {offsets = [0, 1], sizes = [8, 1], strides = [1, 1]} : vector<8x3xf32> to vector<8x1xf32>
    %13 = vector.extract_strided_slice %5 {offsets = [0, 8], sizes = [8, 16], strides = [1, 1]} : vector<8x32xf32> to vector<8x16xf32>
    %14 = vector.broadcast %12 : vector<8x1xf32> to vector<8x16xf32>
    %15 = arith.mulf %14, %13 : vector<8x16xf32>
    %16 = arith.addf %11, %15 : vector<8x16xf32>
    %17 = vector.extract_strided_slice %7 {offsets = [0, 2], sizes = [8, 1], strides = [1, 1]} : vector<8x3xf32> to vector<8x1xf32>
    %18 = vector.extract_strided_slice %5 {offsets = [0, 9], sizes = [8, 16], strides = [1, 1]} : vector<8x32xf32> to vector<8x16xf32>
    %19 = vector.broadcast %17 : vector<8x1xf32> to vector<8x16xf32>
    %20 = arith.mulf %19, %18 : vector<8x16xf32>
    %21 = arith.addf %16, %20 : vector<8x16xf32>
    %c1 = arith.constant 1 : index
    %c0_10 = arith.constant 0 : index
    %c0_11 = arith.constant 0 : index
    %22 = vector.load %arg2[%c1, %c0_10, %c0_11] : memref<4x8x3xf32, #tpu.memory_space<vmem>>, vector<1x8x3xf32>
    %23 = vector.shape_cast %22 : vector<1x8x3xf32> to vector<8x3xf32>
    %24 = vector.extract_strided_slice %23 {offsets = [0, 0], sizes = [8, 1], strides = [1, 1]} : vector<8x3xf32> to vector<8x1xf32>
    %25 = vector.extract_strided_slice %5 {offsets = [0, 6], sizes = [8, 16], strides = [1, 1]} : vector<8x32xf32> to vector<8x16xf32>
    %26 = vector.broadcast %24 : vector<8x1xf32> to vector<8x16xf32>
    %27 = arith.mulf %26, %25 : vector<8x16xf32>
    %28 = vector.extract_strided_slice %23 {offsets = [0, 1], sizes = [8, 1], strides = [1, 1]} : vector<8x3xf32> to vector<8x1xf32>
    %29 = vector.extract_strided_slice %5 {offsets = [0, 8], sizes = [8, 16], strides = [1, 1]} : vector<8x32xf32> to vector<8x16xf32>
    %30 = vector.broadcast %28 : vector<8x1xf32> to vector<8x16xf32>
    %31 = arith.mulf %30, %29 : vector<8x16xf32>
    %32 = arith.addf %27, %31 : vector<8x16xf32>
    %33 = vector.extract_strided_slice %23 {offsets = [0, 2], sizes = [8, 1], strides = [1, 1]} : vector<8x3xf32> to vector<8x1xf32>
    %34 = vector.extract_strided_slice %5 {offsets = [0, 10], sizes = [8, 16], strides = [1, 1]} : vector<8x32xf32> to vector<8x16xf32>
    %35 = vector.broadcast %33 : vector<8x1xf32> to vector<8x16xf32>
    %36 = arith.mulf %35, %34 : vector<8x16xf32>
    %37 = arith.addf %32, %36 : vector<8x16xf32>
    %c2 = arith.constant 2 : index
    %c0_12 = arith.constant 0 : index
    %c0_13 = arith.constant 0 : index
    %38 = vector.load %arg2[%c2, %c0_12, %c0_13] : memref<4x8x3xf32, #tpu.memory_space<vmem>>, vector<1x8x3xf32>
    %39 = vector.shape_cast %38 : vector<1x8x3xf32> to vector<8x3xf32>
    %40 = vector.extract_strided_slice %39 {offsets = [0, 0], sizes = [8, 1], strides = [1, 1]} : vector<8x3xf32> to vector<8x1xf32>
    %41 = vector.extract_strided_slice %5 {offsets = [0, 4], sizes = [8, 16], strides = [1, 1]} : vector<8x32xf32> to vector<8x16xf32>
    %42 = vector.broadcast %40 : vector<8x1xf32> to vector<8x16xf32>
    %43 = arith.mulf %42, %41 : vector<8x16xf32>
    %44 = vector.extract_strided_slice %39 {offsets = [0, 1], sizes = [8, 1], strides = [1, 1]} : vector<8x3xf32> to vector<8x1xf32>
    %45 = vector.extract_strided_slice %5 {offsets = [0, 8], sizes = [8, 16], strides = [1, 1]} : vector<8x32xf32> to vector<8x16xf32>
    %46 = vector.broadcast %44 : vector<8x1xf32> to vector<8x16xf32>
    %47 = arith.mulf %46, %45 : vector<8x16xf32>
    %48 = arith.addf %43, %47 : vector<8x16xf32>
    %49 = vector.extract_strided_slice %39 {offsets = [0, 2], sizes = [8, 1], strides = [1, 1]} : vector<8x3xf32> to vector<8x1xf32>
    %50 = vector.extract_strided_slice %5 {offsets = [0, 12], sizes = [8, 16], strides = [1, 1]} : vector<8x32xf32> to vector<8x16xf32>
    %51 = vector.broadcast %49 : vector<8x1xf32> to vector<8x16xf32>
    %52 = arith.mulf %51, %50 : vector<8x16xf32>
    %53 = arith.addf %48, %52 : vector<8x16xf32>
    %c3 = arith.constant 3 : index
    %c0_14 = arith.constant 0 : index
    %c0_15 = arith.constant 0 : index
    %54 = vector.load %arg2[%c3, %c0_14, %c0_15] : memref<4x8x3xf32, #tpu.memory_space<vmem>>, vector<1x8x3xf32>
    %55 = vector.shape_cast %54 : vector<1x8x3xf32> to vector<8x3xf32>
    %56 = vector.extract_strided_slice %55 {offsets = [0, 0], sizes = [8, 1], strides = [1, 1]} : vector<8x3xf32> to vector<8x1xf32>
    %57 = vector.extract_strided_slice %5 {offsets = [0, 0], sizes = [8, 16], strides = [1, 1]} : vector<8x32xf32> to vector<8x16xf32>
    %58 = vector.broadcast %56 : vector<8x1xf32> to vector<8x16xf32>
    %59 = arith.mulf %58, %57 : vector<8x16xf32>
    %60 = vector.extract_strided_slice %55 {offsets = [0, 1], sizes = [8, 1], strides = [1, 1]} : vector<8x3xf32> to vector<8x1xf32>
    %61 = vector.extract_strided_slice %5 {offsets = [0, 8], sizes = [8, 16], strides = [1, 1]} : vector<8x32xf32> to vector<8x16xf32>
    %62 = vector.broadcast %60 : vector<8x1xf32> to vector<8x16xf32>
    %63 = arith.mulf %62, %61 : vector<8x16xf32>
    %64 = arith.addf %59, %63 : vector<8x16xf32>
    %65 = vector.extract_strided_slice %55 {offsets = [0, 2], sizes = [8, 1], strides = [1, 1]} : vector<8x3xf32> to vector<8x1xf32>
    %66 = vector.extract_strided_slice %5 {offsets = [0, 16], sizes = [8, 16], strides = [1, 1]} : vector<8x32xf32> to vector<8x16xf32>
    %67 = vector.broadcast %65 : vector<8x1xf32> to vector<8x16xf32>
    %68 = arith.mulf %67, %66 : vector<8x16xf32>
    %69 = arith.addf %64, %68 : vector<8x16xf32>
    %70 = tpu.concatenate %21, %37, %53, %69 in 0 : vector<8x16xf32>, vector<8x16xf32>, vector<8x16xf32>, vector<8x16xf32> -> vector<32x16xf32>
    %c0_16 = arith.constant 0 : index
    %c0_17 = arith.constant 0 : index
    %71 = vector.load %arg10[%c0_16, %c0_17] : memref<32x32xf32, #tpu.memory_space<vmem>>, vector<32x16xf32>
    tpu.vector_store %arg10[%c0_16, %c0_17], %70 {strides = array<i32>} : memref<32x32xf32, #tpu.memory_space<vmem>>, vector<32x16xf32>,
    %c1_18 = arith.constant 1 : index
    %c0_19 = arith.constant 0 : index
    %c0_20 = arith.constant 0 : index
    %72 = vector.load %arg1[%c1_18, %c0_19, %c0_20] : memref<2x8x16xf32, #tpu.memory_space<vmem>>, vector<1x8x16xf32>
    %73 = vector.shape_cast %72 : vector<1x8x16xf32> to vector<8x16xf32>
    %c0_21 = arith.constant 0 : index
    %c8_22 = arith.constant 8 : index
    %74 = vector.load %arg9[%c0_21, %c8_22] : memref<8x32xf32, #tpu.memory_space<vmem>>, vector<8x16xf32>
    tpu.vector_store %arg9[%c0_21, %c8_22], %73 {strides = array<i32>} : memref<8x32xf32, #tpu.memory_space<vmem>>, vector<8x16xf32>,
    %c0_23 = arith.constant 0 : index
    %c0_24 = arith.constant 0 : index
    %75 = vector.load %arg9[%c0_23, %c0_24] : memref<8x32xf32, #tpu.memory_space<vmem>>, vector<8x32xf32>
    %c0_25 = arith.constant 0 : index
    %c0_26 = arith.constant 0 : index
    %c0_27 = arith.constant 0 : index
    %76 = vector.load %arg2[%c0_25, %c0_26, %c0_27] : memref<4x8x3xf32, #tpu.memory_space<vmem>>, vector<1x8x3xf32>
    %77 = vector.shape_cast %76 : vector<1x8x3xf32> to vector<8x3xf32>
    %78 = vector.extract_strided_slice %77 {offsets = [0, 0], sizes = [8, 1], strides = [1, 1]} : vector<8x3xf32> to vector<8x1xf32>
    %79 = vector.extract_strided_slice %75 {offsets = [0, 7], sizes = [8, 16], strides = [1, 1]} : vector<8x32xf32> to vector<8x16xf32>
    %80 = vector.broadcast %78 : vector<8x1xf32> to vector<8x16xf32>
    %81 = arith.mulf %80, %79 : vector<8x16xf32>
    %82 = vector.extract_strided_slice %77 {offsets = [0, 1], sizes = [8, 1], strides = [1, 1]} : vector<8x3xf32> to vector<8x1xf32>
    %83 = vector.extract_strided_slice %75 {offsets = [0, 8], sizes = [8, 16], strides = [1, 1]} : vector<8x32xf32> to vector<8x16xf32>
    %84 = vector.broadcast %82 : vector<8x1xf32> to vector<8x16xf32>
    %85 = arith.mulf %84, %83 : vector<8x16xf32>
    %86 = arith.addf %81, %85 : vector<8x16xf32>
    %87 = vector.extract_strided_slice %77 {offsets = [0, 2], sizes = [8, 1], strides = [1, 1]} : vector<8x3xf32> to vector<8x1xf32>
    %88 = vector.extract_strided_slice %75 {offsets = [0, 9], sizes = [8, 16], strides = [1, 1]} : vector<8x32xf32> to vector<8x16xf32>
    %89 = vector.broadcast %87 : vector<8x1xf32> to vector<8x16xf32>
    %90 = arith.mulf %89, %88 : vector<8x16xf32>
    %91 = arith.addf %86, %90 : vector<8x16xf32>
    %c1_28 = arith.constant 1 : index
    %c0_29 = arith.constant 0 : index
    %c0_30 = arith.constant 0 : index
    %92 = vector.load %arg2[%c1_28, %c0_29, %c0_30] : memref<4x8x3xf32, #tpu.memory_space<vmem>>, vector<1x8x3xf32>
    %93 = vector.shape_cast %92 : vector<1x8x3xf32> to vector<8x3xf32>
    %94 = vector.extract_strided_slice %93 {offsets = [0, 0], sizes = [8, 1], strides = [1, 1]} : vector<8x3xf32> to vector<8x1xf32>
    %95 = vector.extract_strided_slice %75 {offsets = [0, 6], sizes = [8, 16], strides = [1, 1]} : vector<8x32xf32> to vector<8x16xf32>
    %96 = vector.broadcast %94 : vector<8x1xf32> to vector<8x16xf32>
    %97 = arith.mulf %96, %95 : vector<8x16xf32>
    %98 = vector.extract_strided_slice %93 {offsets = [0, 1], sizes = [8, 1], strides = [1, 1]} : vector<8x3xf32> to vector<8x1xf32>
    %99 = vector.extract_strided_slice %75 {offsets = [0, 8], sizes = [8, 16], strides = [1, 1]} : vector<8x32xf32> to vector<8x16xf32>
    %100 = vector.broadcast %98 : vector<8x1xf32> to vector<8x16xf32>
    %101 = arith.mulf %100, %99 : vector<8x16xf32>
    %102 = arith.addf %97, %101 : vector<8x16xf32>
    %103 = vector.extract_strided_slice %93 {offsets = [0, 2], sizes = [8, 1], strides = [1, 1]} : vector<8x3xf32> to vector<8x1xf32>
    %104 = vector.extract_strided_slice %75 {offsets = [0, 10], sizes = [8, 16], strides = [1, 1]} : vector<8x32xf32> to vector<8x16xf32>
    %105 = vector.broadcast %103 : vector<8x1xf32> to vector<8x16xf32>
    %106 = arith.mulf %105, %104 : vector<8x16xf32>
    %107 = arith.addf %102, %106 : vector<8x16xf32>
    %c2_31 = arith.constant 2 : index
    %c0_32 = arith.constant 0 : index
    %c0_33 = arith.constant 0 : index
    %108 = vector.load %arg2[%c2_31, %c0_32, %c0_33] : memref<4x8x3xf32, #tpu.memory_space<vmem>>, vector<1x8x3xf32>
    %109 = vector.shape_cast %108 : vector<1x8x3xf32> to vector<8x3xf32>
    %110 = vector.extract_strided_slice %109 {offsets = [0, 0], sizes = [8, 1], strides = [1, 1]} : vector<8x3xf32> to vector<8x1xf32>
    %111 = vector.extract_strided_slice %75 {offsets = [0, 4], sizes = [8, 16], strides = [1, 1]} : vector<8x32xf32> to vector<8x16xf32>
    %112 = vector.broadcast %110 : vector<8x1xf32> to vector<8x16xf32>
    %113 = arith.mulf %112, %111 : vector<8x16xf32>
    %114 = vector.extract_strided_slice %109 {offsets = [0, 1], sizes = [8, 1], strides = [1, 1]} : vector<8x3xf32> to vector<8x1xf32>
    %115 = vector.extract_strided_slice %75 {offsets = [0, 8], sizes = [8, 16], strides = [1, 1]} : vector<8x32xf32> to vector<8x16xf32>
    %116 = vector.broadcast %114 : vector<8x1xf32> to vector<8x16xf32>
    %117 = arith.mulf %116, %115 : vector<8x16xf32>
    %118 = arith.addf %113, %117 : vector<8x16xf32>
    %119 = vector.extract_strided_slice %109 {offsets = [0, 2], sizes = [8, 1], strides = [1, 1]} : vector<8x3xf32> to vector<8x1xf32>
    %120 = vector.extract_strided_slice %75 {offsets = [0, 12], sizes = [8, 16], strides = [1, 1]} : vector<8x32xf32> to vector<8x16xf32>
    %121 = vector.broadcast %119 : vector<8x1xf32> to vector<8x16xf32>
    %122 = arith.mulf %121, %120 : vector<8x16xf32>
    %123 = arith.addf %118, %122 : vector<8x16xf32>
    %c3_34 = arith.constant 3 : index
    %c0_35 = arith.constant 0 : index
    %c0_36 = arith.constant 0 : index
    %124 = vector.load %arg2[%c3_34, %c0_35, %c0_36] : memref<4x8x3xf32, #tpu.memory_space<vmem>>, vector<1x8x3xf32>
    %125 = vector.shape_cast %124 : vector<1x8x3xf32> to vector<8x3xf32>
    %126 = vector.extract_strided_slice %125 {offsets = [0, 0], sizes = [8, 1], strides = [1, 1]} : vector<8x3xf32> to vector<8x1xf32>
    %127 = vector.extract_strided_slice %75 {offsets = [0, 0], sizes = [8, 16], strides = [1, 1]} : vector<8x32xf32> to vector<8x16xf32>
    %128 = vector.broadcast %126 : vector<8x1xf32> to vector<8x16xf32>
    %129 = arith.mulf %128, %127 : vector<8x16xf32>
    %130 = vector.extract_strided_slice %125 {offsets = [0, 1], sizes = [8, 1], strides = [1, 1]} : vector<8x3xf32> to vector<8x1xf32>
    %131 = vector.extract_strided_slice %75 {offsets = [0, 8], sizes = [8, 16], strides = [1, 1]} : vector<8x32xf32> to vector<8x16xf32>
    %132 = vector.broadcast %130 : vector<8x1xf32> to vector<8x16xf32>
    %133 = arith.mulf %132, %131 : vector<8x16xf32>
    %134 = arith.addf %129, %133 : vector<8x16xf32>
    %135 = vector.extract_strided_slice %125 {offsets = [0, 2], sizes = [8, 1], strides = [1, 1]} : vector<8x3xf32> to vector<8x1xf32>
    %136 = vector.extract_strided_slice %75 {offsets = [0, 16], sizes = [8, 16], strides = [1, 1]} : vector<8x32xf32> to vector<8x16xf32>
    %137 = vector.broadcast %135 : vector<8x1xf32> to vector<8x16xf32>
    %138 = arith.mulf %137, %136 : vector<8x16xf32>
    %139 = arith.addf %134, %138 : vector<8x16xf32>
    %140 = tpu.concatenate %91, %107, %123, %139 in 0 : vector<8x16xf32>, vector<8x16xf32>, vector<8x16xf32>, vector<8x16xf32> -> vector<32x16xf32>
    %c0_37 = arith.constant 0 : index
    %c16 = arith.constant 16 : index
    %141 = vector.load %arg10[%c0_37, %c16] : memref<32x32xf32, #tpu.memory_space<vmem>>, vector<32x16xf32>
    tpu.vector_store %arg10[%c0_37, %c16], %140 {strides = array<i32>} : memref<32x32xf32, #tpu.memory_space<vmem>>, vector<32x16xf32>,
    %c0_38 = arith.constant 0 : index
    %c0_39 = arith.constant 0 : index
    %142 = vector.load %arg3[%c0_38, %c0_39] : memref<16x32xf32, #tpu.memory_space<vmem>>, vector<16x32xf32>
    %c0_40 = arith.constant 0 : index
    %c0_41 = arith.constant 0 : index
    %143 = vector.load %arg10[%c0_40, %c0_41] : memref<32x32xf32, #tpu.memory_space<vmem>>, vector<32x32xf32>
    %cst_42 = arith.constant dense<0.000000e+00> : vector<16x32xf32>
    %144 = tpu.matmul %142, %143, %cst_42 {dimension_numbers = #tpu.dot_dimension_numbers<[1], [0], [0], [1], [0, 0, 1, 1], [], []>, precision = #tpu.contract_precision<fp32>} : vector<16x32xf32>, vector<32x32xf32>, vector<16x32xf32> -> vector<16x32xf32>
    %c0_43 = arith.constant 0 : index
    %c0_44 = arith.constant 0 : index
    %145 = vector.load %arg4[%c0_43, %c0_44] : memref<16x1xf32, #tpu.memory_space<vmem>>, vector<16x1xf32>
    %146 = vector.broadcast %145 : vector<16x1xf32> to vector<16x32xf32>
    %147 = arith.addf %144, %146 : vector<16x32xf32>
    %cst_45 = arith.constant dense<0.000000e+00> : vector<16xf32>
    %148 = vector.multi_reduction <add>, %147, %cst_45 [1] : vector<16x32xf32> to vector<16xf32>
    %149 = vector.shape_cast %148 : vector<16xf32> to vector<16x1xf32>
    %cst_46 = arith.constant 3.125000e-02 : f32
    %150 = vector.broadcast %cst_46 : f32 to vector<16x1xf32>
    %151 = arith.mulf %149, %150 : vector<16x1xf32>
    %152 = vector.broadcast %151 : vector<16x1xf32> to vector<16x32xf32>
    %153 = arith.subf %147, %152 : vector<16x32xf32>
    %154 = arith.mulf %153, %153 : vector<16x32xf32>
    %cst_47 = arith.constant dense<0.000000e+00> : vector<16xf32>
    %155 = vector.multi_reduction <add>, %154, %cst_47 [1] : vector<16x32xf32> to vector<16xf32>
    %156 = vector.shape_cast %155 : vector<16xf32> to vector<16x1xf32>
    %cst_48 = arith.constant 3.125000e-02 : f32
    %157 = vector.broadcast %cst_48 : f32 to vector<16x1xf32>
    %158 = arith.mulf %156, %157 : vector<16x1xf32>
    %c0_49 = arith.constant 0 : index
    %c0_50 = arith.constant 0 : index
    %159 = vector.load %arg5[%c0_49, %c0_50] : memref<16x1xf32, #tpu.memory_space<vmem>>, vector<16x1xf32>
    %cst_51 = arith.constant 9.99999974E-6 : f32
    %160 = vector.broadcast %cst_51 : f32 to vector<16x1xf32>
    %161 = arith.addf %158, %160 : vector<16x1xf32>
    %162 = math.rsqrt %161 : vector<16x1xf32>
    %163 = arith.mulf %159, %162 : vector<16x1xf32>
    %164 = vector.broadcast %163 : vector<16x1xf32> to vector<16x32xf32>
    %165 = arith.mulf %153, %164 : vector<16x32xf32>
    %c0_52 = arith.constant 0 : index
    %c0_53 = arith.constant 0 : index
    %166 = vector.load %arg6[%c0_52, %c0_53] : memref<16x1xf32, #tpu.memory_space<vmem>>, vector<16x1xf32>
    %167 = vector.broadcast %166 : vector<16x1xf32> to vector<16x32xf32>
    %168 = arith.addf %165, %167 : vector<16x32xf32>
    %cst_54 = arith.constant 0.000000e+00 : f32
    %169 = vector.broadcast %cst_54 : f32 to vector<16x32xf32>
    %170 = arith.maximumf %168, %169 : vector<16x32xf32>
    %171 = vector.extract_strided_slice %170 {offsets = [0, 0], sizes = [16, 16], strides = [1, 1]} : vector<16x32xf32> to vector<16x16xf32>
    %cst_55 = arith.constant dense<0.000000e+00> : vector<16xf32>
    %172 = vector.multi_reduction <add>, %171, %cst_55 [1] : vector<16x16xf32> to vector<16xf32>
    %173 = vector.shape_cast %172 : vector<16xf32> to vector<16x1xf32>
    %cst_56 = arith.constant 6.250000e-02 : f32
    %174 = vector.broadcast %cst_56 : f32 to vector<16x1xf32>
    %175 = arith.mulf %173, %174 : vector<16x1xf32>
    %cst_57 = arith.constant 0.000000e+00 : f32
    %176 = vector.broadcast %cst_57 : f32 to vector<1x1xf32>
    %177 = tpu.concatenate %176, %175, %176 in 0 : vector<1x1xf32>, vector<16x1xf32>, vector<1x1xf32> -> vector<18x1xf32>
    %c0_58 = arith.constant 0 : index
    %178 = memref.load %arg7[%c0_58] : memref<3xf32, #tpu.memory_space<smem>>
    %179 = vector.extract_strided_slice %177 {offsets = [0, 0], sizes = [16, 1], strides = [1, 1]} : vector<18x1xf32> to vector<16x1xf32>
    %180 = vector.broadcast %178 : f32 to vector<16x1xf32>
    %181 = arith.mulf %180, %179 : vector<16x1xf32>
    %c1_59 = arith.constant 1 : index
    %182 = memref.load %arg7[%c1_59] : memref<3xf32, #tpu.memory_space<smem>>
    %183 = vector.extract_strided_slice %177 {offsets = [1, 0], sizes = [16, 1], strides = [1, 1]} : vector<18x1xf32> to vector<16x1xf32>
    %184 = vector.broadcast %182 : f32 to vector<16x1xf32>
    %185 = arith.mulf %184, %183 : vector<16x1xf32>
    %186 = arith.addf %181, %185 : vector<16x1xf32>
    %c2_60 = arith.constant 2 : index
    %187 = memref.load %arg7[%c2_60] : memref<3xf32, #tpu.memory_space<smem>>
    %188 = vector.extract_strided_slice %177 {offsets = [2, 0], sizes = [16, 1], strides = [1, 1]} : vector<18x1xf32> to vector<16x1xf32>
    %189 = vector.broadcast %187 : f32 to vector<16x1xf32>
    %190 = arith.mulf %189, %188 : vector<16x1xf32>
    %191 = arith.addf %186, %190 : vector<16x1xf32>
    %192 = arith.negf %191 : vector<16x1xf32>
    %193 = math.exp %192 : vector<16x1xf32>
    %cst_61 = arith.constant 1.000000e+00 : f32
    %194 = vector.broadcast %cst_61 : f32 to vector<16x1xf32>
    %195 = arith.addf %194, %193 : vector<16x1xf32>
    %196 = arith.divf %194, %195 : vector<16x1xf32>
    %197 = vector.broadcast %196 : vector<16x1xf32> to vector<16x16xf32>
    %198 = arith.mulf %171, %197 : vector<16x16xf32>
    %c0_62 = arith.constant 0 : index
    %c0_63 = arith.constant 0 : index
    %c0_64 = arith.constant 0 : index
    %199 = vector.load %arg8[%c0_62, %c0_63, %c0_64] : memref<2x16x16xf32, #tpu.memory_space<vmem>>, vector<1x16x16xf32>
    %200 = vector.shape_cast %199 : vector<1x16x16xf32> to vector<16x16xf32>
    %201 = vector.shape_cast %198 : vector<16x16xf32> to vector<1x16x16xf32>
    tpu.vector_store %arg8[%c0_62, %c0_63, %c0_64], %201 {strides = array<i32>} : memref<2x16x16xf32, #tpu.memory_space<vmem>>, vector<1x16x16xf32>,
    %202 = vector.extract_strided_slice %170 {offsets = [0, 16], sizes = [16, 16], strides = [1, 1]} : vector<16x32xf32> to vector<16x16xf32>
    %cst_65 = arith.constant dense<0.000000e+00> : vector<16xf32>
    %203 = vector.multi_reduction <add>, %202, %cst_65 [1] : vector<16x16xf32> to vector<16xf32>
    %204 = vector.shape_cast %203 : vector<16xf32> to vector<16x1xf32>
    %cst_66 = arith.constant 6.250000e-02 : f32
    %205 = vector.broadcast %cst_66 : f32 to vector<16x1xf32>
    %206 = arith.mulf %204, %205 : vector<16x1xf32>
    %cst_67 = arith.constant 0.000000e+00 : f32
    %207 = vector.broadcast %cst_67 : f32 to vector<1x1xf32>
    %208 = tpu.concatenate %207, %206, %207 in 0 : vector<1x1xf32>, vector<16x1xf32>, vector<1x1xf32> -> vector<18x1xf32>
    %c0_68 = arith.constant 0 : index
    %209 = memref.load %arg7[%c0_68] : memref<3xf32, #tpu.memory_space<smem>>
    %210 = vector.extract_strided_slice %208 {offsets = [0, 0], sizes = [16, 1], strides = [1, 1]} : vector<18x1xf32> to vector<16x1xf32>
    %211 = vector.broadcast %209 : f32 to vector<16x1xf32>
    %212 = arith.mulf %211, %210 : vector<16x1xf32>
    %c1_69 = arith.constant 1 : index
    %213 = memref.load %arg7[%c1_69] : memref<3xf32, #tpu.memory_space<smem>>
    %214 = vector.extract_strided_slice %208 {offsets = [1, 0], sizes = [16, 1], strides = [1, 1]} : vector<18x1xf32> to vector<16x1xf32>
    %215 = vector.broadcast %213 : f32 to vector<16x1xf32>
    %216 = arith.mulf %215, %214 : vector<16x1xf32>
    %217 = arith.addf %212, %216 : vector<16x1xf32>
    %c2_70 = arith.constant 2 : index
    %218 = memref.load %arg7[%c2_70] : memref<3xf32, #tpu.memory_space<smem>>
    %219 = vector.extract_strided_slice %208 {offsets = [2, 0], sizes = [16, 1], strides = [1, 1]} : vector<18x1xf32> to vector<16x1xf32>
    %220 = vector.broadcast %218 : f32 to vector<16x1xf32>
    %221 = arith.mulf %220, %219 : vector<16x1xf32>
    %222 = arith.addf %217, %221 : vector<16x1xf32>
    %223 = arith.negf %222 : vector<16x1xf32>
    %224 = math.exp %223 : vector<16x1xf32>
    %cst_71 = arith.constant 1.000000e+00 : f32
    %225 = vector.broadcast %cst_71 : f32 to vector<16x1xf32>
    %226 = arith.addf %225, %224 : vector<16x1xf32>
    %227 = arith.divf %225, %226 : vector<16x1xf32>
    %228 = vector.broadcast %227 : vector<16x1xf32> to vector<16x16xf32>
    %229 = arith.mulf %202, %228 : vector<16x16xf32>
    %c1_72 = arith.constant 1 : index
    %c0_73 = arith.constant 0 : index
    %c0_74 = arith.constant 0 : index
    %230 = vector.load %arg8[%c1_72, %c0_73, %c0_74] : memref<2x16x16xf32, #tpu.memory_space<vmem>>, vector<1x16x16xf32>
    %231 = vector.shape_cast %230 : vector<1x16x16xf32> to vector<16x16xf32>
    %232 = vector.shape_cast %229 : vector<16x16xf32> to vector<1x16x16xf32>
    tpu.vector_store %arg8[%c1_72, %c0_73, %c0_74], %232 {strides = array<i32>} : memref<2x16x16xf32, #tpu.memory_space<vmem>>, vector<1x16x16xf32>,
    return
  }
  func.func @transform_0(%arg0: i32) -> (i32, i32, i32) {
    %c0_i32 = arith.constant 0 : i32
    %c0_i32_0 = arith.constant 0 : i32
    %c0_i32_1 = arith.constant 0 : i32
    %c0_i32_2 = arith.constant 0 : i32
    return %c0_i32, %c0_i32_0, %c0_i32_1 : i32, i32, i32
  }
  func.func @transform_1(%arg0: i32) -> (i32, i32, i32) {
    %c0_i32 = arith.constant 0 : i32
    %c0_i32_0 = arith.constant 0 : i32
    %c0_i32_1 = arith.constant 0 : i32
    %c0_i32_2 = arith.constant 0 : i32
    return %c0_i32, %c0_i32_0, %c0_i32_1 : i32, i32, i32
  }
  func.func @transform_2(%arg0: i32) -> (i32, i32) {
    %c0_i32 = arith.constant 0 : i32
    %c0_i32_0 = arith.constant 0 : i32
    %c0_i32_1 = arith.constant 0 : i32
    return %c0_i32, %c0_i32_0 : i32, i32
  }
  func.func @transform_3(%arg0: i32) -> (i32, i32) {
    %c0_i32 = arith.constant 0 : i32
    %c0_i32_0 = arith.constant 0 : i32
    %c0_i32_1 = arith.constant 0 : i32
    return %c0_i32, %c0_i32_0 : i32, i32
  }
  func.func @transform_4(%arg0: i32) -> (i32, i32) {
    %c0_i32 = arith.constant 0 : i32
    %c0_i32_0 = arith.constant 0 : i32
    %c0_i32_1 = arith.constant 0 : i32
    return %c0_i32, %c0_i32_0 : i32, i32
  }
  func.func @transform_5(%arg0: i32) -> (i32, i32) {
    %c0_i32 = arith.constant 0 : i32
    %c0_i32_0 = arith.constant 0 : i32
    %c0_i32_1 = arith.constant 0 : i32
    return %c0_i32, %c0_i32_0 : i32, i32
  }
  func.func @transform_6(%arg0: i32) -> i32 {
    %c0_i32 = arith.constant 0 : i32
    %c0_i32_0 = arith.constant 0 : i32
    return %c0_i32 : i32
  }
  func.func @transform_7(%arg0: i32) -> (i32, i32, i32) {
    %c0_i32 = arith.constant 0 : i32
    %c0_i32_0 = arith.constant 0 : i32
    %c0_i32_1 = arith.constant 0 : i32
    %c0_i32_2 = arith.constant 0 : i32
    return %c0_i32, %c0_i32_0, %c0_i32_1 : i32, i32, i32
  }
}

</mosaic_0001>

<llo_original>
// kernel: multi_scale_temporal_conv.1
$region0: #{multi_scale_temporal_conv.1}
  #allocation0 [shape = 'u32[]', space=smem, size = 0x4, offset = 0x4, fixed_abs, tag = 'smem constant byte address 0x4 - core index']
  #allocation1 [shape = 'u32[144,128]{1,0:T(1,128)}', space=vmem, size = 0x12000, scoped, tag = 'internal scratch']
  #allocation2 [shape = 'f32[8,32]{1,0:T(8,128)}', space=vmem, size = 0x1000, scoped, tag = 'scratch operand']
  #allocation3 [shape = 'f32[32,32]{1,0:T(8,128)}', space=vmem, size = 0x4000, scoped, tag = 'scratch operand']
  %s0 = inlined_call_operand.vmem [shape: f32[2,8,16], index: 0, kind: input, shape index: {}]
  %s1 = inlined_call_operand.vmem [shape: f32[4,8,3], index: 1, kind: input, shape index: {}]
  %s2 = inlined_call_operand.vmem [shape: f32[16,32], index: 2, kind: input, shape index: {}]
  %s3 = inlined_call_operand.vmem [shape: f32[16,1], index: 3, kind: input, shape index: {}]
  %s4 = inlined_call_operand.vmem [shape: f32[16,1], index: 4, kind: input, shape index: {}]
  %s5 = inlined_call_operand.vmem [shape: f32[16,1], index: 5, kind: input, shape index: {}]
  %s6 = inlined_call_operand.vmem [shape: f32[3], index: 6, kind: input, shape index: {}]
  %s7 = inlined_call_operand.hbm [shape: f32[2,16,16], index: 7, kind: output, shape index: {}]
  %s8 = sld [smem:[#allocation0]]
  $region42: #{multi_scale_temporal_conv.1} parent=0
    _
  %s10 = ssub.s32 1, %s8
  %s11 = scalar_select 0, %s10, %s8
  $region1: #{multi_scale_temporal_conv.1} parent=0
    #allocation4 [shape = 'u8[512]{0}', space=smem, size = 0x200, scoped, tag = 'input window, operand 6, single buffered']
    #allocation5 [shape = 's32[1]{0}', space=sflag, size = 0x4, scoped, tag = 'scoped memory for multi_scale_temporal_conv.1']
    #allocation6 [shape = 's32[1]{0}', space=sflag, size = 0x4, scoped, tag = 'scoped memory for multi_scale_temporal_conv.1']
    #allocation7 [shape = 'u8[16384]{0}', space=vmem, size = 0x4000, scoped, tag = 'output window, operand 0, single buffered']
    %12 = vsyncpa [#allocation6], 0
    %13 = vsyncpa [#allocation5], 0
    // Predicated region
    $region2: #{multi_scale_temporal_conv.1} parent=1 // pred_check
      _
    $region3: #{multi_scale_temporal_conv.1} parent=1 // pred_check_branch
      %15 = sbr.rel (0) target = $region5
    $region4: #{multi_scale_temporal_conv.1} parent=1 // pred_region
      _
    $region5: #{multi_scale_temporal_conv.1} parent=1 // pred_fallthru
      _
    // Predicated region
    $region6: #{multi_scale_temporal_conv.1} parent=1 // pred_check
      _
    $region7: #{multi_scale_temporal_conv.1} parent=1 // pred_check_branch
      %17 = sbr.rel (0) target = $region9
    $region8: #{multi_scale_temporal_conv.1} parent=1 // pred_region
      _
    $region9: #{multi_scale_temporal_conv.1} parent=1 // pred_fallthru
      _
    // Predicated region
    $region10: #{multi_scale_temporal_conv.1} parent=1 // pred_check
      _
    $region11: #{multi_scale_temporal_conv.1} parent=1 // pred_check_branch
      %19 = sbr.rel (0) target = $region13
    $region12: #{multi_scale_temporal_conv.1} parent=1 // pred_region
      _
    $region13: #{multi_scale_temporal_conv.1} parent=1 // pred_fallthru
      _
    // Predicated region
    $region14: #{multi_scale_temporal_conv.1} parent=1 // pred_check
      _
    $region15: #{multi_scale_temporal_conv.1} parent=1 // pred_check_branch
      %21 = sbr.rel (0) target = $region17
    $region16: #{multi_scale_temporal_conv.1} parent=1 // pred_region
      _
    $region17: #{multi_scale_temporal_conv.1} parent=1 // pred_fallthru
      _
    // Predicated region
    $region18: #{multi_scale_temporal_conv.1} parent=1 // pred_check
      _
    $region19: #{multi_scale_temporal_conv.1} parent=1 // pred_check_branch
      %23 = sbr.rel (0) target = $region21
    $region20: #{multi_scale_temporal_conv.1} parent=1 // pred_region
      _
    $region21: #{multi_scale_temporal_conv.1} parent=1 // pred_fallthru
      _
    // Predicated region
    $region22: #{multi_scale_temporal_conv.1} parent=1 // pred_check
      _
    $region23: #{multi_scale_temporal_conv.1} parent=1 // pred_check_branch
      %25 = sbr.rel (0) target = $region25
    $region24: #{multi_scale_temporal_conv.1} parent=1 // pred_region
      _
    $region25: #{multi_scale_temporal_conv.1} parent=1 // pred_fallthru
      _
    // Predicated region
    $region26: #{multi_scale_temporal_conv.1} parent=1 // pred_check
      _
    $region27: #{multi_scale_temporal_conv.1} parent=1 // pred_check_branch
      %27 = sbr.rel (0) target = $region29
    $region28: #{multi_scale_temporal_conv.1} parent=1 // pred_region
      %s29 = ssub.s32 16, 16
      %30 = vsyncadd [#allocation6], %s29
      %s32 = sshll.u32 %s6, 4
      %s33 = int_to_ptr.vmem [resolvable:$true] %s32
      %35 = dma.vmem_to_smem %s33, 16, [#allocation4], [#allocation6]
    $region29: #{multi_scale_temporal_conv.1} parent=1 // pred_fallthru
      _
    // Predicated region
    $region30: #{multi_scale_temporal_conv.1} parent=1 // pred_check
      _
    $region31: #{multi_scale_temporal_conv.1} parent=1 // pred_check_branch
      %37 = sbr.rel (0) target = $region33
    $region32: #{multi_scale_temporal_conv.1} parent=1 // pred_region
      %38 = dma.done [#allocation6], 16
    $region33: #{multi_scale_temporal_conv.1} parent=1 // pred_fallthru
      _
    %39 = sfence
    %vm40 = vcmask 261120
    %41 = vst.msk [vmem:[#allocation2] sm:$0xff] %vm40, 0.0
    %v42 = vld [vmem:[%s0] sm:$0xff]
    %44 = vrot.lane.b32.xlu0 %v42, 8
    %v45 = vpop.permute.xlu0 %44
    %vm47 = vcmask 195648
    %48 = vst.msk [vmem:[#allocation2] sm:$0xff] %vm47, %v45
    %v49 = vld [vmem:[#allocation2] sm:$0xff]
    %v50 = vld [vmem:[%s1] sm:$0xff]
    %52 = vset.pattern.permute.xlu0 0
    %53 = vperm.xlu0 %52, %v50
    %v54 = vpop.permute.xlu0 %53
    %v56 = vmul.f32 %v54, %v49
    %57 = vset.pattern.permute.xlu0 1
    %58 = vperm.xlu0 %57, %v50
    %v59 = vpop.permute.xlu0 %58
    %v61 = vmul.f32 %v59, %v49
    %63 = vrot.lane.b32.xlu0 %v61, 127
    %v64 = vpop.permute.xlu0 %63
    %v66 = vadd.f32 %v56, %v64
    %67 = vset.pattern.permute.xlu0 2
    %68 = vperm.xlu0 %67, %v50
    %v69 = vpop.permute.xlu0 %68
    %v71 = vmul.f32 %v69, %v49
    %73 = vrot.lane.b32.xlu0 %v71, 126
    %v74 = vpop.permute.xlu0 %73
    %v76 = vadd.f32 %v66, %v74
    %s77 = scalar_lea.vmem %s1, 8
    %v78 = vld [vmem:[%s77] sm:$0xff]
    %80 = vset.pattern.permute.xlu0 0
    %81 = vperm.xlu0 %80, %v78
    %v82 = vpop.permute.xlu0 %81
    %v84 = vmul.f32 %v82, %v49
    %85 = vset.pattern.permute.xlu0 1
    %86 = vperm.xlu0 %85, %v78
    %v87 = vpop.permute.xlu0 %86
    %v89 = vmul.f32 %v87, %v49
    %91 = vrot.lane.b32.xlu0 %v89, 126
    %v92 = vpop.permute.xlu0 %91
    %v94 = vadd.f32 %v84, %v92
    %95 = vset.pattern.permute.xlu0 2
    %96 = vperm.xlu0 %95, %v78
    %v97 = vpop.permute.xlu0 %96
    %v99 = vmul.f32 %v97, %v49
    %101 = vrot.lane.b32.xlu0 %v99, 124
    %v102 = vpop.permute.xlu0 %101
    %v104 = vadd.f32 %v94, %v102
    %s105 = scalar_lea.vmem %s1, 16
    %v106 = vld [vmem:[%s105] sm:$0xff]
    %108 = vset.pattern.permute.xlu0 0
    %109 = vperm.xlu0 %108, %v106
    %v110 = vpop.permute.xlu0 %109
    %v112 = vmul.f32 %v110, %v49
    %113 = vset.pattern.permute.xlu0 1
    %114 = vperm.xlu0 %113, %v106
    %v115 = vpop.permute.xlu0 %114
    %v117 = vmul.f32 %v115, %v49
    %119 = vrot.lane.b32.xlu0 %v117, 124
    %v120 = vpop.permute.xlu0 %119
    %v122 = vadd.f32 %v112, %v120
    %123 = vset.pattern.permute.xlu0 2
    %124 = vperm.xlu0 %123, %v106
    %v125 = vpop.permute.xlu0 %124
    %v127 = vmul.f32 %v125, %v49
    %129 = vrot.lane.b32.xlu0 %v127, 120
    %v130 = vpop.permute.xlu0 %129
    %v132 = vadd.f32 %v122, %v130
    %s133 = scalar_lea.vmem %s1, 24
    %v134 = vld [vmem:[%s133] sm:$0xff]
    %136 = vset.pattern.permute.xlu0 0
    %137 = vperm.xlu0 %136, %v134
    %v138 = vpop.permute.xlu0 %137
    %v140 = vmul.f32 %v138, %v49
    %141 = vset.pattern.permute.xlu0 1
    %142 = vperm.xlu0 %141, %v134
    %v143 = vpop.permute.xlu0 %142
    %v145 = vmul.f32 %v143, %v49
    %147 = vrot.lane.b32.xlu0 %v145, 120
    %v148 = vpop.permute.xlu0 %147
    %v150 = vadd.f32 %v140, %v148
    %151 = vset.pattern.permute.xlu0 2
    %152 = vperm.xlu0 %151, %v134
    %v153 = vpop.permute.xlu0 %152
    %v155 = vmul.f32 %v153, %v49
    %157 = vrot.lane.b32.xlu0 %v155, 112
    %v158 = vpop.permute.xlu0 %157
    %v160 = vadd.f32 %v150, %v158
    %162 = vrot.lane.b32.xlu0 %v104, 1
    %v163 = vpop.permute.xlu0 %162
    %165 = vrot.lane.b32.xlu0 %v132, 3
    %v166 = vpop.permute.xlu0 %165
    %168 = vrot.lane.b32.xlu0 %v160, 7
    %v169 = vpop.permute.xlu0 %168
    %171 = vrot.lane.b32.xlu0 %v76, 121
    %v172 = vpop.permute.xlu0 %171
    %173 = vrot.lane.b32.xlu0 %v163, 121
    %v174 = vpop.permute.xlu0 %173
    %175 = vrot.lane.b32.xlu0 %v166, 121
    %v176 = vpop.permute.xlu0 %175
    %177 = vrot.lane.b32.xlu0 %v169, 121
    %v178 = vpop.permute.xlu0 %177
    %vm183 = vcmask 130048
    %184 = vst.msk [vmem:[#allocation3] sm:$0xff] %vm183, %v172
    %185 = vst.msk [vmem:[#allocation3 + $0x8] sm:$0xff] %vm183, %v174
    %186 = vst.msk [vmem:[#allocation3 + $0x10] sm:$0xff] %vm183, %v176
    %187 = vst.msk [vmem:[#allocation3 + $0x18] sm:$0xff] %vm183, %v178
    %s188 = scalar_lea.vmem %s0, 8
    %v189 = vld [vmem:[%s188] sm:$0xff]
    %191 = vrot.lane.b32.xlu0 %v189, 8
    %v192 = vpop.permute.xlu0 %191
    %194 = vst.msk [vmem:[#allocation2] sm:$0xff] %vm47, %v192
    %v195 = vld [vmem:[#allocation2] sm:$0xff]
    %v196 = vld [vmem:[%s1] sm:$0xff]
    %198 = vset.pattern.permute.xlu0 0
    %199 = vperm.xlu0 %198, %v196
    %v200 = vpop.permute.xlu0 %199
    %v202 = vmul.f32 %v200, %v195
    %203 = vset.pattern.permute.xlu0 1
    %204 = vperm.xlu0 %203, %v196
    %v205 = vpop.permute.xlu0 %204
    %v207 = vmul.f32 %v205, %v195
    %209 = vrot.lane.b32.xlu0 %v207, 127
    %v210 = vpop.permute.xlu0 %209
    %v212 = vadd.f32 %v202, %v210
    %213 = vset.pattern.permute.xlu0 2
    %214 = vperm.xlu0 %213, %v196
    %v215 = vpop.permute.xlu0 %214
    %v217 = vmul.f32 %v215, %v195
    %219 = vrot.lane.b32.xlu0 %v217, 126
    %v220 = vpop.permute.xlu0 %219
    %v222 = vadd.f32 %v212, %v220
    %v223 = vld [vmem:[%s77] sm:$0xff]
    %225 = vset.pattern.permute.xlu0 0
    %226 = vperm.xlu0 %225, %v223
    %v227 = vpop.permute.xlu0 %226
    %v229 = vmul.f32 %v227, %v195
    %230 = vset.pattern.permute.xlu0 1
    %231 = vperm.xlu0 %230, %v223
    %v232 = vpop.permute.xlu0 %231
    %v234 = vmul.f32 %v232, %v195
    %236 = vrot.lane.b32.xlu0 %v234, 126
    %v237 = vpop.permute.xlu0 %236
    %v239 = vadd.f32 %v229, %v237
    %240 = vset.pattern.permute.xlu0 2
    %241 = vperm.xlu0 %240, %v223
    %v242 = vpop.permute.xlu0 %241
    %v244 = vmul.f32 %v242, %v195
    %246 = vrot.lane.b32.xlu0 %v244, 124
    %v247 = vpop.permute.xlu0 %246
    %v249 = vadd.f32 %v239, %v247
    %v250 = vld [vmem:[%s105] sm:$0xff]
    %252 = vset.pattern.permute.xlu0 0
    %253 = vperm.xlu0 %252, %v250
    %v254 = vpop.permute.xlu0 %253
    %v256 = vmul.f32 %v254, %v195
    %257 = vset.pattern.permute.xlu0 1
    %258 = vperm.xlu0 %257, %v250
    %v259 = vpop.permute.xlu0 %258
    %v261 = vmul.f32 %v259, %v195
    %263 = vrot.lane.b32.xlu0 %v261, 124
    %v264 = vpop.permute.xlu0 %263
    %v266 = vadd.f32 %v256, %v264
    %267 = vset.pattern.permute.xlu0 2
    %268 = vperm.xlu0 %267, %v250
    %v269 = vpop.permute.xlu0 %268
    %v271 = vmul.f32 %v269, %v195
    %273 = vrot.lane.b32.xlu0 %v271, 120
    %v274 = vpop.permute.xlu0 %273
    %v276 = vadd.f32 %v266, %v274
    %v277 = vld [vmem:[%s133] sm:$0xff]
    %279 = vset.pattern.permute.xlu0 0
    %280 = vperm.xlu0 %279, %v277
    %v281 = vpop.permute.xlu0 %280
    %v283 = vmul.f32 %v281, %v195
    %284 = vset.pattern.permute.xlu0 1
    %285 = vperm.xlu0 %284, %v277
    %v286 = vpop.permute.xlu0 %285
    %v288 = vmul.f32 %v286, %v195
    %290 = vrot.lane.b32.xlu0 %v288, 120
    %v291 = vpop.permute.xlu0 %290
    %v293 = vadd.f32 %v283, %v291
    %294 = vset.pattern.permute.xlu0 2
    %295 = vperm.xlu0 %294, %v277
    %v296 = vpop.permute.xlu0 %295
    %v298 = vmul.f32 %v296, %v195
    %300 = vrot.lane.b32.xlu0 %v298, 112
    %v301 = vpop.permute.xlu0 %300
    %v303 = vadd.f32 %v293, %v301
    %305 = vrot.lane.b32.xlu0 %v249, 1
    %v306 = vpop.permute.xlu0 %305
    %308 = vrot.lane.b32.xlu0 %v276, 3
    %v309 = vpop.permute.xlu0 %308
    %311 = vrot.lane.b32.xlu0 %v303, 7
    %v312 = vpop.permute.xlu0 %311
    %314 = vrot.lane.b32.xlu0 %v222, 9
    %v315 = vpop.permute.xlu0 %314
    %316 = vrot.lane.b32.xlu0 %v306, 9
    %v317 = vpop.permute.xlu0 %316
    %318 = vrot.lane.b32.xlu0 %v309, 9
    %v319 = vpop.permute.xlu0 %318
    %320 = vrot.lane.b32.xlu0 %v312, 9
    %v321 = vpop.permute.xlu0 %320
    %vm326 = vcmask 261248
    %327 = vst.msk [vmem:[#allocation3] sm:$0xff] %vm326, %v315
    %328 = vst.msk [vmem:[#allocation3 + $0x8] sm:$0xff] %vm326, %v317
    %329 = vst.msk [vmem:[#allocation3 + $0x10] sm:$0xff] %vm326, %v319
    %330 = vst.msk [vmem:[#allocation3 + $0x18] sm:$0xff] %vm326, %v321
    %v331 = vld [vmem:[%s2] sm:$0xff]
    %v332 = vld [vmem:[%s2 + $0x8] sm:$0xff]
    %v333 = vld [vmem:[#allocation3] sm:$0xff]
    %v334 = vld [vmem:[#allocation3 + $0x8] sm:$0xff]
    %v335 = vld [vmem:[#allocation3 + $0x10] sm:$0xff]
    %v336 = vld [vmem:[#allocation3 + $0x18] sm:$0xff]
    %v337 = vld [vmem:[%s3] sm:$0xff]
    %v338 = vld [vmem:[%s3 + $0x8] sm:$0xff]
    %340 = vset.pattern.permute.xlu0 0
    %341 = vperm.xlu0 %340, %v337
    %v342 = vpop.permute.xlu0 %341
    %345 = vset.pattern.permute.xlu0 0
    %346 = vperm.xlu0 %345, %v338
    %v347 = vpop.permute.xlu0 %346
    %v350 = vsel %vm40, %v331, 0
    %v353 = vsel %vm40, %v332, 0
    %355 = vmatprep.subr.mxu0 0.0
    %356 = vmatpush1.msra.mxu0 0.0
    %357 = vmatprep.subr.mxu0 0.0
    %358 = vmatpush1.msra.mxu0 0.0
    %359 = vmatprep.subr.mxu0 0.0
    %360 = vmatpush1.msra.mxu0 0.0
    %361 = vmatprep.subr.mxu0 0.0
    %362 = vmatpush1.msra.mxu0 0.0
    %363 = vmatprep.subr.mxu0 0.0
    %364 = vmatpush1.msra.mxu0 0.0
    %365 = vmatprep.subr.mxu0 0.0
    %366 = vmatpush1.msra.mxu0 0.0
    %367 = vmatprep.subr.mxu0 0.0
    %368 = vmatpush1.msra.mxu0 0.0
    %369 = vmatprep.subr.mxu0 0.0
    %370 = vmatpush1.msra.mxu0 0.0
    %371 = vmatprep.subr.mxu0 0.0
    %372 = vmatpush1.msra.mxu0 0.0
    %373 = vmatprep.subr.mxu0 0.0
    %374 = vmatpush1.msra.mxu0 0.0
    %375 = vmatprep.subr.mxu0 0.0
    %376 = vmatpush1.msra.mxu0 0.0
    %377 = vmatprep.subr.mxu0 0.0
    %378 = vmatpush1.msra.mxu0 0.0
    %379 = vmatprep.subr.mxu0 0.0
    %v380 = vand.u32 %v336, 4294901760
    %381 = vmatpush1.msra.mxu0 %v380
    %382 = vmatprep.subr.mxu0 0.0
    %v383 = vand.u32 %v335, 4294901760
    %384 = vmatpush1.msra.mxu0 %v383
    %385 = vmatprep.subr.mxu0 0.0
    %v386 = vand.u32 %v334, 4294901760
    %387 = vmatpush1.msra.mxu0 %v386
    %388 = vmatprep.subr.mxu0 0.0
    %v389 = vand.u32 %v333, 4294901760
    %390 = vmatpush1.msra.mxu0 %v389
    %391 = vmatprep.subr.mxu0 0.0
    %392 = vmatpush2.msra.mxu0 0.0
    %393 = vmatprep.subr.mxu0 0.0
    %394 = vmatpush2.msra.mxu0 0.0
    %395 = vmatprep.subr.mxu0 0.0
    %396 = vmatpush2.msra.mxu0 0.0
    %397 = vmatprep.subr.mxu0 0.0
    %398 = vmatpush2.msra.mxu0 0.0
    %399 = vmatprep.subr.mxu0 0.0
    %400 = vmatpush2.msra.mxu0 0.0
    %401 = vmatprep.subr.mxu0 0.0
    %402 = vmatpush2.msra.mxu0 0.0
    %403 = vmatprep.subr.mxu0 0.0
    %404 = vmatpush2.msra.mxu0 0.0
    %405 = vmatprep.subr.mxu0 0.0
    %406 = vmatpush2.msra.mxu0 0.0
    %407 = vmatprep.subr.mxu0 0.0
    %408 = vmatpush2.msra.mxu0 0.0
    %409 = vmatprep.subr.mxu0 0.0
    %410 = vmatpush2.msra.mxu0 0.0
    %411 = vmatprep.subr.mxu0 0.0
    %412 = vmatpush2.msra.mxu0 0.0
    %413 = vmatprep.subr.mxu0 0.0
    %414 = vmatpush2.msra.mxu0 0.0
    %415 = vmatprep.subr.mxu0 0.0
    %416 = vmatpush2.msra.mxu0 0.0
    %417 = vmatprep.subr.mxu0 0.0
    %418 = vmatpush2.msra.mxu0 0.0
    %419 = vmatprep.subr.mxu0 0.0
    %420 = vmatpush2.msra.mxu0 0.0
    %421 = vmatprep.subr.mxu0 0.0
    %422 = vmatpush2.msra.mxu0 0.0
    %423 = vmatprep.mubr.f32.mxu0 0.0
    %v424 = vand.u32 %v350, 4294901760
    %v425 = vsub.f32 %v350, %v424
    %v426 = vand.u32 %v425, 4294901760
    %v427 = vsub.f32 %v425, %v426
    %v428 = vand.u32 %v427, 4294901760
    %429 = vmatmul.mubr.f32.gmra.mxu0 %v428
    %v430 = vpop.f32.mrf.mxu0
    %v431 = vadd.f32 %v342, %v430
    %v432 = vpop.f32.mrf.mxu0
    %433 = vmatprep.mubr.f32.mxu0 0.0
    %v434 = vand.u32 %v353, 4294901760
    %v435 = vsub.f32 %v353, %v434
    %v436 = vand.u32 %v435, 4294901760
    %v437 = vsub.f32 %v435, %v436
    %v438 = vand.u32 %v437, 4294901760
    %439 = vmatmul.mubr.f32.gmra.mxu0 %v438
    %v440 = vpop.f32.mrf.mxu0
    %v441 = vadd.f32 %v347, %v440
    %v442 = vpop.f32.mrf.mxu0
    %443 = vdwg.mxu0
    %444 = vmatprep.subr.mxu0 0.0
    %445 = vmatpush1.msra.mxu0 0.0
    %446 = vmatprep.subr.mxu0 0.0
    %447 = vmatpush1.msra.mxu0 0.0
    %448 = vmatprep.subr.mxu0 0.0
    %449 = vmatpush1.msra.mxu0 0.0
    %450 = vmatprep.subr.mxu0 0.0
    %451 = vmatpush1.msra.mxu0 0.0
    %452 = vmatprep.subr.mxu0 0.0
    %453 = vmatpush1.msra.mxu0 0.0
    %454 = vmatprep.subr.mxu0 0.0
    %455 = vmatpush1.msra.mxu0 0.0
    %456 = vmatprep.subr.mxu0 0.0
    %457 = vmatpush1.msra.mxu0 0.0
    %458 = vmatprep.subr.mxu0 0.0
    %459 = vmatpush1.msra.mxu0 0.0
    %460 = vmatprep.subr.mxu0 0.0
    %461 = vmatpush1.msra.mxu0 0.0
    %462 = vmatprep.subr.mxu0 0.0
    %463 = vmatpush1.msra.mxu0 0.0
    %464 = vmatprep.subr.mxu0 0.0
    %465 = vmatpush1.msra.mxu0 0.0
    %466 = vmatprep.subr.mxu0 0.0
    %467 = vmatpush1.msra.mxu0 0.0
    %468 = vmatprep.subr.mxu0 0.0
    %v469 = vand.u32 %v336, 4294901760
    %v470 = vsub.f32 %v336, %v469
    %v471 = vand.u32 %v470, 4294901760
    %v472 = vsub.f32 %v470, %v471
    %v473 = vand.u32 %v472, 4294901760
    %474 = vmatpush1.msra.mxu0 %v473
    %475 = vmatprep.subr.mxu0 0.0
    %v476 = vand.u32 %v335, 4294901760
    %v477 = vsub.f32 %v335, %v476
    %v478 = vand.u32 %v477, 4294901760
    %v479 = vsub.f32 %v477, %v478
    %v480 = vand.u32 %v479, 4294901760
    %481 = vmatpush1.msra.mxu0 %v480
    %482 = vmatprep.subr.mxu0 0.0
    %v483 = vand.u32 %v334, 4294901760
    %v484 = vsub.f32 %v334, %v483
    %v485 = vand.u32 %v484, 4294901760
    %v486 = vsub.f32 %v484, %v485
    %v487 = vand.u32 %v486, 4294901760
    %488 = vmatpush1.msra.mxu0 %v487
    %489 = vmatprep.subr.mxu0 0.0
    %v490 = vand.u32 %v333, 4294901760
    %v491 = vsub.f32 %v333, %v490
    %v492 = vand.u32 %v491, 4294901760
    %v493 = vsub.f32 %v491, %v492
    %v494 = vand.u32 %v493, 4294901760
    %495 = vmatpush1.msra.mxu0 %v494
    %496 = vmatprep.subr.mxu0 0.0
    %497 = vmatpush2.msra.mxu0 0.0
    %498 = vmatprep.subr.mxu0 0.0
    %499 = vmatpush2.msra.mxu0 0.0
    %500 = vmatprep.subr.mxu0 0.0
    %501 = vmatpush2.msra.mxu0 0.0
    %502 = vmatprep.subr.mxu0 0.0
    %503 = vmatpush2.msra.mxu0 0.0
    %504 = vmatprep.subr.mxu0 0.0
    %505 = vmatpush2.msra.mxu0 0.0
    %506 = vmatprep.subr.mxu0 0.0
    %507 = vmatpush2.msra.mxu0 0.0
    %508 = vmatprep.subr.mxu0 0.0
    %509 = vmatpush2.msra.mxu0 0.0
    %510 = vmatprep.subr.mxu0 0.0
    %511 = vmatpush2.msra.mxu0 0.0
    %512 = vmatprep.subr.mxu0 0.0
    %513 = vmatpush2.msra.mxu0 0.0
    %514 = vmatprep.subr.mxu0 0.0
    %515 = vmatpush2.msra.mxu0 0.0
    %516 = vmatprep.subr.mxu0 0.0
    %517 = vmatpush2.msra.mxu0 0.0
    %518 = vmatprep.subr.mxu0 0.0
    %519 = vmatpush2.msra.mxu0 0.0
    %520 = vmatprep.subr.mxu0 0.0
    %521 = vmatpush2.msra.mxu0 0.0
    %522 = vmatprep.subr.mxu0 0.0
    %523 = vmatpush2.msra.mxu0 0.0
    %524 = vmatprep.subr.mxu0 0.0
    %525 = vmatpush2.msra.mxu0 0.0
    %526 = vmatprep.subr.mxu0 0.0
    %527 = vmatpush2.msra.mxu0 0.0
    %528 = vmatprep.mubr.f32.mxu0 0.0
    %v529 = vand.u32 %v350, 4294901760
    %530 = vmatmul.mubr.f32.gmra.mxu0 %v529
    %v531 = vpop.f32.mrf.mxu0
    %v532 = vadd.f32 %v431, %v531
    %v533 = vpop.f32.mrf.mxu0
    %534 = vmatprep.mubr.f32.mxu0 0.0
    %v535 = vand.u32 %v353, 4294901760
    %536 = vmatmul.mubr.f32.gmra.mxu0 %v535
    %v537 = vpop.f32.mrf.mxu0
    %v538 = vadd.f32 %v441, %v537
    %v539 = vpop.f32.mrf.mxu0
    %540 = vdwg.mxu0
    %541 = vmatprep.subr.mxu0 0.0
    %542 = vmatpush1.msra.mxu0 0.0
    %543 = vmatprep.subr.mxu0 0.0
    %544 = vmatpush1.msra.mxu0 0.0
    %545 = vmatprep.subr.mxu0 0.0
    %546 = vmatpush1.msra.mxu0 0.0
    %547 = vmatprep.subr.mxu0 0.0
    %548 = vmatpush1.msra.mxu0 0.0
    %549 = vmatprep.subr.mxu0 0.0
    %550 = vmatpush1.msra.mxu0 0.0
    %551 = vmatprep.subr.mxu0 0.0
    %552 = vmatpush1.msra.mxu0 0.0
    %553 = vmatprep.subr.mxu0 0.0
    %554 = vmatpush1.msra.mxu0 0.0
    %555 = vmatprep.subr.mxu0 0.0
    %556 = vmatpush1.msra.mxu0 0.0
    %557 = vmatprep.subr.mxu0 0.0
    %558 = vmatpush1.msra.mxu0 0.0
    %559 = vmatprep.subr.mxu0 0.0
    %560 = vmatpush1.msra.mxu0 0.0
    %561 = vmatprep.subr.mxu0 0.0
    %562 = vmatpush1.msra.mxu0 0.0
    %563 = vmatprep.subr.mxu0 0.0
    %564 = vmatpush1.msra.mxu0 0.0
    %565 = vmatprep.subr.mxu0 0.0
    %v566 = vand.u32 %v336, 4294901760
    %v567 = vsub.f32 %v336, %v566
    %568 = vmatpush1.msra.mxu0 %v567
    %569 = vmatprep.subr.mxu0 0.0
    %v570 = vand.u32 %v335, 4294901760
    %v571 = vsub.f32 %v335, %v570
    %572 = vmatpush1.msra.mxu0 %v571
    %573 = vmatprep.subr.mxu0 0.0
    %v574 = vand.u32 %v334, 4294901760
    %v575 = vsub.f32 %v334, %v574
    %576 = vmatpush1.msra.mxu0 %v575
    %577 = vmatprep.subr.mxu0 0.0
    %v578 = vand.u32 %v333, 4294901760
    %v579 = vsub.f32 %v333, %v578
    %580 = vmatpush1.msra.mxu0 %v579
    %581 = vmatprep.subr.mxu0 0.0
    %582 = vmatpush2.msra.mxu0 0.0
    %583 = vmatprep.subr.mxu0 0.0
    %584 = vmatpush2.msra.mxu0 0.0
    %585 = vmatprep.subr.mxu0 0.0
    %586 = vmatpush2.msra.mxu0 0.0
    %587 = vmatprep.subr.mxu0 0.0
    %588 = vmatpush2.msra.mxu0 0.0
    %589 = vmatprep.subr.mxu0 0.0
    %590 = vmatpush2.msra.mxu0 0.0
    %591 = vmatprep.subr.mxu0 0.0
    %592 = vmatpush2.msra.mxu0 0.0
    %593 = vmatprep.subr.mxu0 0.0
    %594 = vmatpush2.msra.mxu0 0.0
    %595 = vmatprep.subr.mxu0 0.0
    %596 = vmatpush2.msra.mxu0 0.0
    %597 = vmatprep.subr.mxu0 0.0
    %598 = vmatpush2.msra.mxu0 0.0
    %599 = vmatprep.subr.mxu0 0.0
    %600 = vmatpush2.msra.mxu0 0.0
    %601 = vmatprep.subr.mxu0 0.0
    %602 = vmatpush2.msra.mxu0 0.0
    %603 = vmatprep.subr.mxu0 0.0
    %604 = vmatpush2.msra.mxu0 0.0
    %605 = vmatprep.subr.mxu0 0.0
    %606 = vmatpush2.msra.mxu0 0.0
    %607 = vmatprep.subr.mxu0 0.0
    %608 = vmatpush2.msra.mxu0 0.0
    %609 = vmatprep.subr.mxu0 0.0
    %610 = vmatpush2.msra.mxu0 0.0
    %611 = vmatprep.subr.mxu0 0.0
    %612 = vmatpush2.msra.mxu0 0.0
    %613 = vmatprep.mubr.f32.mxu0 0.0
    %v614 = vand.u32 %v350, 4294901760
    %v615 = vsub.f32 %v350, %v614
    %616 = vmatmul.mubr.f32.gmra.mxu0 %v615
    %v617 = vpop.f32.mrf.mxu0
    %v618 = vadd.f32 %v532, %v617
    %v619 = vpop.f32.mrf.mxu0
    %620 = vmatprep.mubr.f32.mxu0 0.0
    %v621 = vand.u32 %v353, 4294901760
    %v622 = vsub.f32 %v353, %v621
    %623 = vmatmul.mubr.f32.gmra.mxu0 %v622
    %v624 = vpop.f32.mrf.mxu0
    %v625 = vadd.f32 %v538, %v624
    %v626 = vpop.f32.mrf.mxu0
    %627 = vdwg.mxu0
    %628 = vmatprep.subr.mxu0 0.0
    %629 = vmatpush1.msra.mxu0 0.0
    %630 = vmatprep.subr.mxu0 0.0
    %631 = vmatpush1.msra.mxu0 0.0
    %632 = vmatprep.subr.mxu0 0.0
    %633 = vmatpush1.msra.mxu0 0.0
    %634 = vmatprep.subr.mxu0 0.0
    %635 = vmatpush1.msra.mxu0 0.0
    %636 = vmatprep.subr.mxu0 0.0
    %637 = vmatpush1.msra.mxu0 0.0
    %638 = vmatprep.subr.mxu0 0.0
    %639 = vmatpush1.msra.mxu0 0.0
    %640 = vmatprep.subr.mxu0 0.0
    %641 = vmatpush1.msra.mxu0 0.0
    %642 = vmatprep.subr.mxu0 0.0
    %643 = vmatpush1.msra.mxu0 0.0
    %644 = vmatprep.subr.mxu0 0.0
    %645 = vmatpush1.msra.mxu0 0.0
    %646 = vmatprep.subr.mxu0 0.0
    %647 = vmatpush1.msra.mxu0 0.0
    %648 = vmatprep.subr.mxu0 0.0
    %649 = vmatpush1.msra.mxu0 0.0
    %650 = vmatprep.subr.mxu0 0.0
    %651 = vmatpush1.msra.mxu0 0.0
    %652 = vmatprep.subr.mxu0 0.0
    %v653 = vand.u32 %v336, 4294901760
    %654 = vmatpush1.msra.mxu0 %v653
    %655 = vmatprep.subr.mxu0 0.0
    %v656 = vand.u32 %v335, 4294901760
    %657 = vmatpush1.msra.mxu0 %v656
    %658 = vmatprep.subr.mxu0 0.0
    %v659 = vand.u32 %v334, 4294901760
    %660 = vmatpush1.msra.mxu0 %v659
    %661 = vmatprep.subr.mxu0 0.0
    %v662 = vand.u32 %v333, 4294901760
    %663 = vmatpush1.msra.mxu0 %v662
    %664 = vmatprep.subr.mxu0 0.0
    %665 = vmatpush2.msra.mxu0 0.0
    %666 = vmatprep.subr.mxu0 0.0
    %667 = vmatpush2.msra.mxu0 0.0
    %668 = vmatprep.subr.mxu0 0.0
    %669 = vmatpush2.msra.mxu0 0.0
    %670 = vmatprep.subr.mxu0 0.0
    %671 = vmatpush2.msra.mxu0 0.0
    %672 = vmatprep.subr.mxu0 0.0
    %673 = vmatpush2.msra.mxu0 0.0
    %674 = vmatprep.subr.mxu0 0.0
    %675 = vmatpush2.msra.mxu0 0.0
    %676 = vmatprep.subr.mxu0 0.0
    %677 = vmatpush2.msra.mxu0 0.0
    %678 = vmatprep.subr.mxu0 0.0
    %679 = vmatpush2.msra.mxu0 0.0
    %680 = vmatprep.subr.mxu0 0.0
    %681 = vmatpush2.msra.mxu0 0.0
    %682 = vmatprep.subr.mxu0 0.0
    %683 = vmatpush2.msra.mxu0 0.0
    %684 = vmatprep.subr.mxu0 0.0
    %685 = vmatpush2.msra.mxu0 0.0
    %686 = vmatprep.subr.mxu0 0.0
    %687 = vmatpush2.msra.mxu0 0.0
    %688 = vmatprep.subr.mxu0 0.0
    %689 = vmatpush2.msra.mxu0 0.0
    %690 = vmatprep.subr.mxu0 0.0
    %691 = vmatpush2.msra.mxu0 0.0
    %692 = vmatprep.subr.mxu0 0.0
    %693 = vmatpush2.msra.mxu0 0.0
    %694 = vmatprep.subr.mxu0 0.0
    %695 = vmatpush2.msra.mxu0 0.0
    %696 = vmatprep.mubr.f32.mxu0 0.0
    %v697 = vand.u32 %v350, 4294901760
    %v698 = vsub.f32 %v350, %v697
    %v699 = vand.u32 %v698, 4294901760
    %700 = vmatmul.mubr.f32.gmra.mxu0 %v699
    %v701 = vpop.f32.mrf.mxu0
    %v702 = vadd.f32 %v618, %v701
    %v703 = vpop.f32.mrf.mxu0
    %704 = vmatprep.mubr.f32.mxu0 0.0
    %v705 = vand.u32 %v353, 4294901760
    %v706 = vsub.f32 %v353, %v705
    %v707 = vand.u32 %v706, 4294901760
    %708 = vmatmul.mubr.f32.gmra.mxu0 %v707
    %v709 = vpop.f32.mrf.mxu0
    %v710 = vadd.f32 %v625, %v709
    %v711 = vpop.f32.mrf.mxu0
    %712 = vdwg.mxu0
    %713 = vmatprep.subr.mxu0 0.0
    %714 = vmatpush1.msra.mxu0 0.0
    %715 = vmatprep.subr.mxu0 0.0
    %716 = vmatpush1.msra.mxu0 0.0
    %717 = vmatprep.subr.mxu0 0.0
    %718 = vmatpush1.msra.mxu0 0.0
    %719 = vmatprep.subr.mxu0 0.0
    %720 = vmatpush1.msra.mxu0 0.0
    %721 = vmatprep.subr.mxu0 0.0
    %722 = vmatpush1.msra.mxu0 0.0
    %723 = vmatprep.subr.mxu0 0.0
    %724 = vmatpush1.msra.mxu0 0.0
    %725 = vmatprep.subr.mxu0 0.0
    %726 = vmatpush1.msra.mxu0 0.0
    %727 = vmatprep.subr.mxu0 0.0
    %728 = vmatpush1.msra.mxu0 0.0
    %729 = vmatprep.subr.mxu0 0.0
    %730 = vmatpush1.msra.mxu0 0.0
    %731 = vmatprep.subr.mxu0 0.0
    %732 = vmatpush1.msra.mxu0 0.0
    %733 = vmatprep.subr.mxu0 0.0
    %734 = vmatpush1.msra.mxu0 0.0
    %735 = vmatprep.subr.mxu0 0.0
    %736 = vmatpush1.msra.mxu0 0.0
    %737 = vmatprep.subr.mxu0 0.0
    %v738 = vand.u32 %v336, 4294901760
    %v739 = vsub.f32 %v336, %v738
    %v740 = vand.u32 %v739, 4294901760
    %741 = vmatpush1.msra.mxu0 %v740
    %742 = vmatprep.subr.mxu0 0.0
    %v743 = vand.u32 %v335, 4294901760
    %v744 = vsub.f32 %v335, %v743
    %v745 = vand.u32 %v744, 4294901760
    %746 = vmatpush1.msra.mxu0 %v745
    %747 = vmatprep.subr.mxu0 0.0
    %v748 = vand.u32 %v334, 4294901760
    %v749 = vsub.f32 %v334, %v748
    %v750 = vand.u32 %v749, 4294901760
    %751 = vmatpush1.msra.mxu0 %v750
    %752 = vmatprep.subr.mxu0 0.0
    %v753 = vand.u32 %v333, 4294901760
    %v754 = vsub.f32 %v333, %v753
    %v755 = vand.u32 %v754, 4294901760
    %756 = vmatpush1.msra.mxu0 %v755
    %757 = vmatprep.subr.mxu0 0.0
    %758 = vmatpush2.msra.mxu0 0.0
    %759 = vmatprep.subr.mxu0 0.0
    %760 = vmatpush2.msra.mxu0 0.0
    %761 = vmatprep.subr.mxu0 0.0
    %762 = vmatpush2.msra.mxu0 0.0
    %763 = vmatprep.subr.mxu0 0.0
    %764 = vmatpush2.msra.mxu0 0.0
    %765 = vmatprep.subr.mxu0 0.0
    %766 = vmatpush2.msra.mxu0 0.0
    %767 = vmatprep.subr.mxu0 0.0
    %768 = vmatpush2.msra.mxu0 0.0
    %769 = vmatprep.subr.mxu0 0.0
    %770 = vmatpush2.msra.mxu0 0.0
    %771 = vmatprep.subr.mxu0 0.0
    %772 = vmatpush2.msra.mxu0 0.0
    %773 = vmatprep.subr.mxu0 0.0
    %774 = vmatpush2.msra.mxu0 0.0
    %775 = vmatprep.subr.mxu0 0.0
    %776 = vmatpush2.msra.mxu0 0.0
    %777 = vmatprep.subr.mxu0 0.0
    %778 = vmatpush2.msra.mxu0 0.0
    %779 = vmatprep.subr.mxu0 0.0
    %780 = vmatpush2.msra.mxu0 0.0
    %781 = vmatprep.subr.mxu0 0.0
    %782 = vmatpush2.msra.mxu0 0.0
    %783 = vmatprep.subr.mxu0 0.0
    %784 = vmatpush2.msra.mxu0 0.0
    %785 = vmatprep.subr.mxu0 0.0
    %786 = vmatpush2.msra.mxu0 0.0
    %787 = vmatprep.subr.mxu0 0.0
    %788 = vmatpush2.msra.mxu0 0.0
    %789 = vmatprep.mubr.f32.mxu0 0.0
    %v790 = vand.u32 %v350, 4294901760
    %791 = vmatmul.mubr.f32.gmra.mxu0 %v790
    %v792 = vpop.f32.mrf.mxu0
    %v793 = vadd.f32 %v702, %v792
    %v794 = vpop.f32.mrf.mxu0
    %795 = vmatprep.mubr.f32.mxu0 0.0
    %v796 = vand.u32 %v353, 4294901760
    %797 = vmatmul.mubr.f32.gmra.mxu0 %v796
    %v798 = vpop.f32.mrf.mxu0
    %v799 = vadd.f32 %v710, %v798
    %v800 = vpop.f32.mrf.mxu0
    %801 = vdwg.mxu0
    %802 = vmatprep.subr.mxu0 0.0
    %803 = vmatpush1.msra.mxu0 0.0
    %804 = vmatprep.subr.mxu0 0.0
    %805 = vmatpush1.msra.mxu0 0.0
    %806 = vmatprep.subr.mxu0 0.0
    %807 = vmatpush1.msra.mxu0 0.0
    %808 = vmatprep.subr.mxu0 0.0
    %809 = vmatpush1.msra.mxu0 0.0
    %810 = vmatprep.subr.mxu0 0.0
    %811 = vmatpush1.msra.mxu0 0.0
    %812 = vmatprep.subr.mxu0 0.0
    %813 = vmatpush1.msra.mxu0 0.0
    %814 = vmatprep.subr.mxu0 0.0
    %815 = vmatpush1.msra.mxu0 0.0
    %816 = vmatprep.subr.mxu0 0.0
    %817 = vmatpush1.msra.mxu0 0.0
    %818 = vmatprep.subr.mxu0 0.0
    %819 = vmatpush1.msra.mxu0 0.0
    %820 = vmatprep.subr.mxu0 0.0
    %821 = vmatpush1.msra.mxu0 0.0
    %822 = vmatprep.subr.mxu0 0.0
    %823 = vmatpush1.msra.mxu0 0.0
    %824 = vmatprep.subr.mxu0 0.0
    %825 = vmatpush1.msra.mxu0 0.0
    %826 = vmatprep.subr.mxu0 0.0
    %v827 = vand.u32 %v336, 4294901760
    %828 = vmatpush1.msra.mxu0 %v827
    %829 = vmatprep.subr.mxu0 0.0
    %v830 = vand.u32 %v335, 4294901760
    %831 = vmatpush1.msra.mxu0 %v830
    %832 = vmatprep.subr.mxu0 0.0
    %v833 = vand.u32 %v334, 4294901760
    %834 = vmatpush1.msra.mxu0 %v833
    %835 = vmatprep.subr.mxu0 0.0
    %v836 = vand.u32 %v333, 4294901760
    %837 = vmatpush1.msra.mxu0 %v836
    %838 = vmatprep.subr.mxu0 0.0
    %839 = vmatpush2.msra.mxu0 0.0
    %840 = vmatprep.subr.mxu0 0.0
    %841 = vmatpush2.msra.mxu0 0.0
    %842 = vmatprep.subr.mxu0 0.0
    %843 = vmatpush2.msra.mxu0 0.0
    %844 = vmatprep.subr.mxu0 0.0
    %845 = vmatpush2.msra.mxu0 0.0
    %846 = vmatprep.subr.mxu0 0.0
    %847 = vmatpush2.msra.mxu0 0.0
    %848 = vmatprep.subr.mxu0 0.0
    %849 = vmatpush2.msra.mxu0 0.0
    %850 = vmatprep.subr.mxu0 0.0
    %851 = vmatpush2.msra.mxu0 0.0
    %852 = vmatprep.subr.mxu0 0.0
    %853 = vmatpush2.msra.mxu0 0.0
    %854 = vmatprep.subr.mxu0 0.0
    %855 = vmatpush2.msra.mxu0 0.0
    %856 = vmatprep.subr.mxu0 0.0
    %857 = vmatpush2.msra.mxu0 0.0
    %858 = vmatprep.subr.mxu0 0.0
    %859 = vmatpush2.msra.mxu0 0.0
    %860 = vmatprep.subr.mxu0 0.0
    %861 = vmatpush2.msra.mxu0 0.0
    %862 = vmatprep.subr.mxu0 0.0
    %863 = vmatpush2.msra.mxu0 0.0
    %864 = vmatprep.subr.mxu0 0.0
    %865 = vmatpush2.msra.mxu0 0.0
    %866 = vmatprep.subr.mxu0 0.0
    %867 = vmatpush2.msra.mxu0 0.0
    %868 = vmatprep.subr.mxu0 0.0
    %869 = vmatpush2.msra.mxu0 0.0
    %870 = vmatprep.mubr.f32.mxu0 0.0
    %v871 = vand.u32 %v350, 4294901760
    %872 = vmatmul.mubr.f32.gmra.mxu0 %v871
    %v873 = vpop.f32.mrf.mxu0
    %v874 = vadd.f32 %v793, %v873
    %v875 = vpop.f32.mrf.mxu0
    %876 = vmatprep.mubr.f32.mxu0 0.0
    %v877 = vand.u32 %v353, 4294901760
    %878 = vmatmul.mubr.f32.gmra.mxu0 %v877
    %v879 = vpop.f32.mrf.mxu0
    %v880 = vadd.f32 %v799, %v879
    %v881 = vpop.f32.mrf.mxu0
    %882 = vdwg.mxu0
    %v883 = vsel %vm40, %v874, 0.0
    %884 = vadd.xlane.f32.xlu0 %v883
    %v885 = vpop.xlane.xlu0 %884
    %v886 = vsel %vm40, %v880, 0.0
    %887 = vadd.xlane.f32.xlu0 %v886
    %v888 = vpop.xlane.xlu0 %887
    %v889 = vmul.f32 %v885, 0.03125
    %v890 = vmul.f32 %v888, 0.03125
    %v891 = vsub.f32 %v874, %v889
    %v892 = vsub.f32 %v880, %v890
    %v893 = vmul.f32 %v891, %v891
    %v894 = vmul.f32 %v892, %v892
    %v895 = vsel %vm40, %v893, 0.0
    %896 = vadd.xlane.f32.xlu0 %v895
    %v897 = vpop.xlane.xlu0 %896
    %v898 = vsel %vm40, %v894, 0.0
    %899 = vadd.xlane.f32.xlu0 %v898
    %v900 = vpop.xlane.xlu0 %899
    %v901 = vmul.f32 %v897, 0.03125
    %v902 = vmul.f32 %v900, 0.03125
    %v903 = vld [vmem:[%s4] sm:$0xff]
    %v904 = vld [vmem:[%s4 + $0x8] sm:$0xff]
    %v905 = vadd.f32 %v901, 1e-05
    %v906 = vadd.f32 %v902, 1e-05
    %v907 = vrsqrt.pop %v905
    %v908 = vrsqrt.pop %v906
    %v909 = vmul.f32 %v903, %v907
    %v910 = vmul.f32 %v904, %v908
    %912 = vset.pattern.permute.xlu0 0
    %913 = vperm.xlu0 %912, %v909
    %v914 = vpop.permute.xlu0 %913
    %917 = vset.pattern.permute.xlu0 0
    %918 = vperm.xlu0 %917, %v910
    %v919 = vpop.permute.xlu0 %918
    %v921 = vmul.f32 %v891, %v914
    %v922 = vmul.f32 %v892, %v919
    %v923 = vld [vmem:[%s5] sm:$0xff]
    %v924 = vld [vmem:[%s5 + $0x8] sm:$0xff]
    %926 = vset.pattern.permute.xlu0 0
    %927 = vperm.xlu0 %926, %v923
    %v928 = vpop.permute.xlu0 %927
    %931 = vset.pattern.permute.xlu0 0
    %932 = vperm.xlu0 %931, %v924
    %v933 = vpop.permute.xlu0 %932
    %v935 = vadd.f32 %v921, %v928
    %v936 = vadd.f32 %v922, %v933
    %v937 = vmax.f32 %v935, 0.0
    %v938 = vmax.f32 %v936, 0.0
    %v939 = vsel %vm183, %v937, 0.0
    %940 = vadd.xlane.f32.xlu0 %v939
    %v941 = vpop.xlane.xlu0 %940
    %v942 = vsel %vm183, %v938, 0.0
    %943 = vadd.xlane.f32.xlu0 %v942
    %v944 = vpop.xlane.xlu0 %943
    %v945 = vmul.f32 %v941, 0.0625
    %v946 = vmul.f32 %v944, 0.0625
    %vm949 = vcmask 1040384
    %v950 = vrot.slane %v945, 7
    %v951 = vrot.slane %v946, 7
    %v952 = vsel %vm949, %v950, %v951
    %v956 = vsel %vm949, 0.0, %v950
    %v957 = vsel %vm949, %v951, 0.0
    %s958 = sld [smem:[#allocation4]]
    %v959 = vstv %s958
    %v960 = vmul.f32 %v959, %v956
    %v961 = vmul.f32 %v959, %v952
    %s962 = sld [smem:[#allocation4 + $0x1]]
    %v963 = vstv %s962
    %v964 = vmul.f32 %v963, %v956
    %v965 = vmul.f32 %v963, %v952
    %v966 = vmul.f32 %v963, %v957
    %vm970 = vcmask 1046528
    %v971 = vrot.slane %v964, 1
    %v972 = vrot.slane %v965, 1
    %v973 = vsel %vm970, %v971, %v972
    %v974 = vrot.slane %v966, 1
    %v975 = vsel %vm970, %v972, %v974
    %v978 = vadd.f32 %v960, %v973
    %v979 = vadd.f32 %v961, %v975
    %s980 = sld [smem:[#allocation4 + $0x2]]
    %v981 = vstv %s980
    %v982 = vmul.f32 %v981, %v956
    %v983 = vmul.f32 %v981, %v952
    %v984 = vmul.f32 %v981, %v957
    %vm988 = vcmask 1045504
    %v989 = vrot.slane %v982, 2
    %v990 = vrot.slane %v983, 2
    %v991 = vsel %vm988, %v989, %v990
    %v992 = vrot.slane %v984, 2
    %v993 = vsel %vm988, %v990, %v992
    %v996 = vadd.f32 %v978, %v991
    %v997 = vadd.f32 %v979, %v993
    %v998 = vxor.u32 %v996, 2147483648
    %v999 = vxor.u32 %v997, 2147483648
    %v1000 = vmul.f32 %v998, 1.442695
    %v1001 = vpow.pop %v1000
    %v1002 = vmul.f32 %v999, 1.442695
    %v1003 = vpow.pop %v1002
    %v1004 = vadd.f32 %v1001, 1.0
    %v1005 = vadd.f32 %v1003, 1.0
    %v1006 = vrcp.pop %v1004
    %v1007 = vmul.f32 1.0, %v1006
    %v1008 = vrcp.pop %v1005
    %v1009 = vmul.f32 1.0, %v1008
    %1011 = vset.pattern.permute.xlu0 0
    %1012 = vperm.xlu0 %1011, %v1007
    %v1013 = vpop.permute.xlu0 %1012
    %1016 = vset.pattern.permute.xlu0 0
    %1017 = vperm.xlu0 %1016, %v1009
    %v1018 = vpop.permute.xlu0 %1017
    %v1020 = vmul.f32 %v937, %v1013
    %v1021 = vmul.f32 %v938, %v1018
    %1022 = vst.msk [vmem:[#allocation7] sm:$0xff] %vm183, %v1020
    %1023 = vst.msk [vmem:[#allocation7 + $0x8] sm:$0xff] %vm183, %v1021
    %1026 = vrot.lane.b32.xlu0 %v937, 112
    %v1027 = vpop.permute.xlu0 %1026
    %1028 = vrot.lane.b32.xlu0 %v938, 112
    %v1029 = vpop.permute.xlu0 %1028
    %v1032 = vsel %vm183, %v1027, 0.0
    %1033 = vadd.xlane.f32.xlu0 %v1032
    %v1034 = vpop.xlane.xlu0 %1033
    %v1035 = vsel %vm183, %v1029, 0.0
    %1036 = vadd.xlane.f32.xlu0 %v1035
    %v1037 = vpop.xlane.xlu0 %1036
    %v1038 = vmul.f32 %v1034, 0.0625
    %v1039 = vmul.f32 %v1037, 0.0625
    %v1042 = vrot.slane %v1038, 7
    %v1043 = vrot.slane %v1039, 7
    %v1044 = vsel %vm949, %v1042, %v1043
    %v1048 = vsel %vm949, 0.0, %v1042
    %v1049 = vsel %vm949, %v1043, 0.0
    %s1050 = sld [smem:[#allocation4]]
    %v1051 = vstv %s1050
    %v1052 = vmul.f32 %v1051, %v1048
    %v1053 = vmul.f32 %v1051, %v1044
    %s1054 = sld [smem:[#allocation4 + $0x1]]
    %v1055 = vstv %s1054
    %v1056 = vmul.f32 %v1055, %v1048
    %v1057 = vmul.f32 %v1055, %v1044
    %v1058 = vmul.f32 %v1055, %v1049
    %v1062 = vrot.slane %v1056, 1
    %v1063 = vrot.slane %v1057, 1
    %v1064 = vsel %vm970, %v1062, %v1063
    %v1065 = vrot.slane %v1058, 1
    %v1066 = vsel %vm970, %v1063, %v1065
    %v1069 = vadd.f32 %v1052, %v1064
    %v1070 = vadd.f32 %v1053, %v1066
    %s1071 = sld [smem:[#allocation4 + $0x2]]
    %v1072 = vstv %s1071
    %v1073 = vmul.f32 %v1072, %v1048
    %v1074 = vmul.f32 %v1072, %v1044
    %v1075 = vmul.f32 %v1072, %v1049
    %v1079 = vrot.slane %v1073, 2
    %v1080 = vrot.slane %v1074, 2
    %v1081 = vsel %vm988, %v1079, %v1080
    %v1082 = vrot.slane %v1075, 2
    %v1083 = vsel %vm988, %v1080, %v1082
    %v1086 = vadd.f32 %v1069, %v1081
    %v1087 = vadd.f32 %v1070, %v1083
    %v1088 = vxor.u32 %v1086, 2147483648
    %v1089 = vxor.u32 %v1087, 2147483648
    %v1090 = vmul.f32 %v1088, 1.442695
    %v1091 = vpow.pop %v1090
    %v1092 = vmul.f32 %v1089, 1.442695
    %v1093 = vpow.pop %v1092
    %v1094 = vadd.f32 %v1091, 1.0
    %v1095 = vadd.f32 %v1093, 1.0
    %v1096 = vrcp.pop %v1094
    %v1097 = vmul.f32 1.0, %v1096
    %v1098 = vrcp.pop %v1095
    %v1099 = vmul.f32 1.0, %v1098
    %1101 = vset.pattern.permute.xlu0 0
    %1102 = vperm.xlu0 %1101, %v1097
    %v1103 = vpop.permute.xlu0 %1102
    %1106 = vset.pattern.permute.xlu0 0
    %1107 = vperm.xlu0 %1106, %v1099
    %v1108 = vpop.permute.xlu0 %1107
    %v1110 = vmul.f32 %v937, %v1103
    %v1111 = vmul.f32 %v938, %v1108
    %1114 = vrot.lane.b32.xlu0 %v1110, 112
    %v1115 = vpop.permute.xlu0 %1114
    %1116 = vrot.lane.b32.xlu0 %v1111, 112
    %v1117 = vpop.permute.xlu0 %1116
    %s1120 = scalar_lea.vmem [#allocation7], 16
    %1121 = vst.msk [vmem:[%s1120] sm:$0xff] %vm183, %v1115
    %1122 = vst.msk [vmem:[%s1120 + $0x8] sm:$0xff] %vm183, %v1117
    // Predicated region
    $region34: #{multi_scale_temporal_conv.1} parent=1 // pred_check
      _
    $region35: #{multi_scale_temporal_conv.1} parent=1 // pred_check_branch
      %1124 = sbr.rel (0) target = $region37
    $region36: #{multi_scale_temporal_conv.1} parent=1 // pred_region
      %s1126 = ssub.s32 512, 512
      %1127 = vsyncadd [#allocation5], %s1126
      %s1128 = sshll.u32 [#allocation7], 4
      %s1129 = int_to_ptr.vmem [resolvable:$true] %s1128
      %1134 = dma.vmem_to_hbm [thread:$0]  %s1129, 512, %s7, [#allocation5], 128, 128, 8
    $region37: #{multi_scale_temporal_conv.1} parent=1 // pred_fallthru
      _
    // Predicated region
    $region38: #{multi_scale_temporal_conv.1} parent=1 // pred_check
      _
    $region39: #{multi_scale_temporal_conv.1} parent=1 // pred_check_branch
      %1136 = sbr.rel (0) target = $region41
    $region40: #{multi_scale_temporal_conv.1} parent=1 // pred_region
      %1137 = dma.done [#allocation5], 512
    $region41: #{multi_scale_temporal_conv.1} parent=1 // pred_fallthru
      _
    %1138 = vsyncpa [#allocation5], 1
    %1139 = vsyncpa [#allocation6], 1

</llo_original>
